<compile_context>
chip_gen: v5e
topology: v5e:2x2
jax: 0.10.0
libtpu: 0.0.40
codegen_flags: <defaults>
</compile_context>

<pallas_src>
import functools

import jax
import jax.numpy as jnp
import numpy as np
from jax.experimental import pallas as pl
from jax.experimental.pallas import tpu as pltpu

_LANE = 128


def _round_up(x, m):
    return (x + m - 1) // m * m


def _gru_kernel(x_ref, wih_ref, gbias_ref, bhn_ref, whh_ref, h_ref, *,
                Hp, Tt, T, mask_tail):
    """One (batch-shard, time-chunk) grid step of the GRU.

    x_ref     : (Tt, Bs, Ip) bf16  time-major one-hot chunk (zero padded)
    wih_ref   : (Ip, 3*Hp)   bf16  W_ih^T, gate-separated / lane-padded, resident
    gbias_ref : (1, 3*Hp)    f32   b_ih (+ b_hh for r,z gates), lane-padded
    bhn_ref   : (1, Hp)      f32   b_hh of the n gate (stays inside r*(...))
    whh_ref   : (Hp, 3*Hp)   bf16  W_hh^T, gate-separated / lane-padded, resident
    h_ref     : (Bs, Hp)     f32   hidden-state carry / final output block
    """
    t_chunk = pl.program_id(1)

    @pl.when(t_chunk == 0)
    def _init():
        h_ref[...] = jnp.zeros_like(h_ref)

    _, Bs, Ip = x_ref.shape
    G3 = 3 * Hp

    wih = wih_ref[...]                                   # (Ip, G3) bf16, resident
    whh = whh_ref[...]                                   # (Hp, G3) bf16, resident
    gbias = gbias_ref[...]                               # (1, G3)  f32
    bhn = jnp.broadcast_to(bhn_ref[...], (Bs, Hp))       # hoisted broadcast

    # Chunk-parallel input projection: ONE MXU matmul for all Tt steps of this
    # chunk (Tt*Bs rows), off the serial critical path of the recurrence.
    x2 = x_ref[...].reshape(Tt * Bs, Ip)                 # bf16
    gi = jnp.dot(x2, wih, preferred_element_type=jnp.float32)   # (Tt*Bs, G3) f32
    gi = (gi + gbias).reshape(Tt, Bs, G3)

    # Sequential recurrence over the chunk (short static unroll, Tt <= 16).
    h = h_ref[...]                                       # (Bs, Hp) f32 carry
    for tt in range(Tt):
        gi_t = gi[tt]                                    # (Bs, G3) leading-axis slice
        gh = jnp.dot(h.astype(whh.dtype), whh,
                     preferred_element_type=jnp.float32)  # (Bs, G3) MXU, f32 acc
        rz = jax.nn.sigmoid(gi_t[:, :2 * Hp] + gh[:, :2 * Hp])   # r|z in one EUP pass
        r = rz[:, :Hp]
        z = rz[:, Hp:]
        n = jnp.tanh(gi_t[:, 2 * Hp:] + r * (gh[:, 2 * Hp:] + bhn))
        h_new = n + z * (h - n)                          # == (1-z)*n + z*h
        if mask_tail:
            # Zero-padded time steps are not a GRU identity -> skip them.
            h_new = jnp.where(t_chunk * Tt + tt < T, h_new, h)
        h = h_new
    h_ref[...] = h


@functools.partial(jax.jit, static_argnames=("t_chunk_size",))
def encoder_forward(x, w_ih, w_hh, b_ih, b_hh, *, t_chunk_size=16):
    """Equivalent of Encoder.forward(x) for a dense batch-first tensor.

    x     : (B, T, I) float32 one-hot sequence (PyTorch batch_first=True)
    w_ih  : (3H, I), w_hh : (3H, H), b_ih/b_hh : (3H,)  (PyTorch GRU params,
            gate order r, z, n)
    returns h of shape (1, B, H), matching `_, h = self.rnn(x, h0); return h`.
    """
    B, T, I = x.shape
    H = w_hh.shape[1]
    f32, bf16 = jnp.float32, jnp.bfloat16

    Hp = _round_up(H, _LANE)
    G3 = 3 * Hp
    Ip = _round_up(I, 16)            # sublane-friendly K for the bf16 projection
    Bp = _round_up(B, 8)             # full-sublane (B, Hp) tiles / unmasked store
    Tt = int(min(t_chunk_size, T))   # short unrolled chunk
    nt = -(-T // Tt)
    Tp = nt * Tt
    mask_tail = (Tp != T)
    nb = 2 if (Bp % 16 == 0) else 1  # megacore batch shards (v7x); no-op otherwise
    Bs = Bp // nb

    # --- gate-separated, lane(128)-padded parameter layout ------------------
    # Padded rows/cols/bias lanes are EXACTLY zero so padded hidden lanes stay
    # zero through the recurrence and never contaminate the real H columns.
    wih_p = jnp.zeros((Ip, G3), f32)
    whh_p = jnp.zeros((Hp, G3), f32)
    for g in range(3):
        wih_p = wih_p.at[:I, g * Hp:g * Hp + H].set(
            jnp.transpose(w_ih[g * H:(g + 1) * H, :]).astype(f32))
        whh_p = whh_p.at[:H, g * Hp:g * Hp + H].set(
            jnp.transpose(w_hh[g * H:(g + 1) * H, :]).astype(f32))

    gbias = jnp.zeros((1, G3), f32)
    gbias = gbias.at[0, 0:H].set(b_ih[0:H] + b_hh[0:H])                 # r: both biases
    gbias = gbias.at[0, Hp:Hp + H].set(b_ih[H:2 * H] + b_hh[H:2 * H])   # z: both biases
    gbias = gbias.at[0, 2 * Hp:2 * Hp + H].set(b_ih[2 * H:3 * H])       # n: input bias
    bhn_p = jnp.zeros((1, Hp), f32).at[0, :H].set(b_hh[2 * H:3 * H])    # n: hidden bias

    # --- pad + time-major + bf16 the streamed input (one-hot exact in bf16) --
    x_p = jnp.pad(x.astype(f32), ((0, Bp - B), (0, Tp - T), (0, Ip - I)))
    x_tm = jnp.transpose(x_p, (1, 0, 2)).astype(bf16)    # (Tp, Bp, Ip)

    kernel = functools.partial(_gru_kernel, Hp=Hp, Tt=Tt, T=T, mask_tail=mask_tail)

    h_pad = pl.pallas_call(
        kernel,
        out_shape=jax.ShapeDtypeStruct((Bp, Hp), f32),
        grid_spec=pltpu.PrefetchScalarGridSpec(
            num_scalar_prefetch=0,
            grid=(nb, nt),
            in_specs=[
                pl.BlockSpec((Tt, Bs, Ip), lambda b, t: (t, b, 0)),  # x chunk (pipelined)
                pl.BlockSpec((Ip, G3), lambda b, t: (0, 0)),         # W_ih^T, resident
                pl.BlockSpec((1, G3), lambda b, t: (0, 0)),          # folded gate biases
                pl.BlockSpec((1, Hp), lambda b, t: (0, 0)),          # b_hn (gated by r)
                pl.BlockSpec((Hp, G3), lambda b, t: (0, 0)),         # W_hh^T, resident
            ],
            out_specs=pl.BlockSpec((Bs, Hp), lambda b, t: (b, 0)),   # h carry/accumulator
        ),
        compiler_params=pltpu.CompilerParams(
            dimension_semantics=("parallel", "arbitrary"),
        ),
    )(x_tm, wih_p.astype(bf16), gbias, bhn_p, whh_p.astype(bf16))

    return h_pad[:B, :H][None, :, :].astype(x.dtype)     # (1, B, H)


def _reference_gru(x, w_ih, w_hh, b_ih, b_hh):
    """Pure-JAX f32 reference of the same GRU (PyTorch semantics)."""
    B, T, I = x.shape
    H = w_hh.shape[1]
    h = jnp.zeros((B, H), jnp.float32)
    hi = jax.lax.Precision.HIGHEST

    def step(h, x_t):
        gi = jnp.dot(x_t, w_ih.T, precision=hi) + b_ih
        gh = jnp.dot(h, w_hh.T, precision=hi) + b_hh
        i_r, i_z, i_n = gi[:, :H], gi[:, H:2 * H], gi[:, 2 * H:]
        h_r, h_z, h_n = gh[:, :H], gh[:, H:2 * H], gh[:, 2 * H:]
        r = jax.nn.sigmoid(i_r + h_r)
        z = jax.nn.sigmoid(i_z + h_z)
        n = jnp.tanh(i_n + r * h_n)
        return (1.0 - z) * n + z * h, None

    h_last, _ = jax.lax.scan(step, h, jnp.transpose(x, (1, 0, 2)))
    return h_last[None, :, :]


if __name__ == "__main__":
    # Small shapes consistent with the module:
    #   input_size = len(char_to_ix_l1) = 61 chars (incl. BEG/END),
    #   hidden_size scaled down from 256 to 32, one-hot float32 inputs.
    # T=20 deliberately exercises the multi-chunk grid (Tt=16 -> 2 chunks) and
    # the tail-step masking path.
    B, T, I, H = 4, 20, 61, 32

    key = jax.random.PRNGKey(0)
    k_idx, k_wih, k_whh, k_bih, k_bhh = jax.random.split(key, 5)

    # make_input_vect equivalent: random char indices -> one-hot float32.
    idx = jax.random.randint(k_idx, (B, T), 0, I)
    x = jax.nn.one_hot(idx, I, dtype=jnp.float32)          # (B, T, I)

    # Deterministic GRU parameters, PyTorch-style U(-1/sqrt(H), 1/sqrt(H)).
    bound = 1.0 / np.sqrt(H)
    w_ih = jax.random.uniform(k_wih, (3 * H, I), jnp.float32, -bound, bound)
    w_hh = jax.random.uniform(k_whh, (3 * H, H), jnp.float32, -bound, bound)
    b_ih = jax.random.uniform(k_bih, (3 * H,), jnp.float32, -bound, bound)
    b_hh = jax.random.uniform(k_bhh, (3 * H,), jnp.float32, -bound, bound)

    h = encoder_forward(x, w_ih, w_hh, b_ih, b_hh)
    h = jax.block_until_ready(h)

    # Tolerance relaxed vs pure-f32 because both matmuls (input projection and
    # recurrence) use bf16 MXU operands (f32 accumulation, f32 gate math) and
    # the rounding compounds over T steps.
    h_ref = _reference_gru(x, w_ih, w_hh, b_ih, b_hh)
    np.testing.assert_allclose(np.asarray(h), np.asarray(h_ref), rtol=3e-2, atol=3e-2)
    assert h.shape == (1, B, H)

    print("KERNEL_OK")
</pallas_src>

<mosaic_0001>
module attributes {stable_mosaic.version = 11 : i64} {
  func.func @_gru_kernel(%arg0: i32, %arg1: i32, %arg2: memref<16x8x64xbf16, #tpu.memory_space<vmem>>, %arg3: memref<64x384xbf16, #tpu.memory_space<vmem>>, %arg4: memref<1x384xf32, #tpu.memory_space<vmem>>, %arg5: memref<1x128xf32, #tpu.memory_space<vmem>>, %arg6: memref<128x384xbf16, #tpu.memory_space<vmem>>, %arg7: memref<8x128xf32, #tpu.memory_space<vmem>>) attributes {dimension_semantics = [#tpu.dimension_semantics<parallel>, #tpu.dimension_semantics<arbitrary>], iteration_bounds = array<i64: 1, 2>, scalar_prefetch = 0 : i64, scratch_operands = 0 : i64, tpu.core_type = #tpu.core_type<tc>, window_params = [{transform_indices = @transform_0, window_bounds = array<i64: 16, 8, 64>}, {pipeline_mode = #tpu.pipeline_mode<synchronous>, transform_indices = @transform_1, window_bounds = array<i64: 64, 384>}, {pipeline_mode = #tpu.pipeline_mode<synchronous>, transform_indices = @transform_2, window_bounds = array<i64: 1, 384>}, {pipeline_mode = #tpu.pipeline_mode<synchronous>, transform_indices = @transform_3, window_bounds = array<i64: 1, 128>}, {pipeline_mode = #tpu.pipeline_mode<synchronous>, transform_indices = @transform_4, window_bounds = array<i64: 128, 384>}, {transform_indices = @transform_5, window_bounds = array<i64: 8, 128>}]} {
    %c0_i32 = arith.constant 0 : i32
    %0 = arith.cmpi eq, %arg1, %c0_i32 : i32
    %1 = arith.extui %0 : i1 to i32
    %c0_i32_0 = arith.constant 0 : i32
    %2 = arith.cmpi ne, %1, %c0_i32_0 : i32
    scf.if %2 {
      %cst_78 = arith.constant 0.000000e+00 : f32
      %449 = vector.broadcast %cst_78 : f32 to vector<8x128xf32>
      %c0_79 = arith.constant 0 : index
      %c0_80 = arith.constant 0 : index
      %450 = vector.load %arg7[%c0_79, %c0_80] : memref<8x128xf32, #tpu.memory_space<vmem>>, vector<8x128xf32>
      tpu.vector_store %arg7[%c0_79, %c0_80], %449 {strides = array<i32>} : memref<8x128xf32, #tpu.memory_space<vmem>>, vector<8x128xf32>,
    } else {
    }
    %c0 = arith.constant 0 : index
    %c0_1 = arith.constant 0 : index
    %3 = vector.load %arg3[%c0, %c0_1] : memref<64x384xbf16, #tpu.memory_space<vmem>>, vector<64x384xbf16>
    %c0_2 = arith.constant 0 : index
    %c0_3 = arith.constant 0 : index
    %4 = vector.load %arg6[%c0_2, %c0_3] : memref<128x384xbf16, #tpu.memory_space<vmem>>, vector<128x384xbf16>
    %c0_4 = arith.constant 0 : index
    %c0_5 = arith.constant 0 : index
    %5 = vector.load %arg4[%c0_4, %c0_5] : memref<1x384xf32, #tpu.memory_space<vmem>>, vector<1x384xf32>
    %c0_6 = arith.constant 0 : index
    %c0_7 = arith.constant 0 : index
    %6 = vector.load %arg5[%c0_6, %c0_7] : memref<1x128xf32, #tpu.memory_space<vmem>>, vector<1x128xf32>
    %7 = vector.shape_cast %6 : vector<1x128xf32> to vector<1x128xf32>
    %8 = vector.broadcast %7 : vector<1x128xf32> to vector<8x128xf32>
    %c0_8 = arith.constant 0 : index
    %c0_9 = arith.constant 0 : index
    %c0_10 = arith.constant 0 : index
    %9 = vector.load %arg2[%c0_8, %c0_9, %c0_10] : memref<16x8x64xbf16, #tpu.memory_space<vmem>>, vector<16x8x64xbf16>
    %10 = vector.shape_cast %9 : vector<16x8x64xbf16> to vector<128x64xbf16>
    %cst = arith.constant dense<0.000000e+00> : vector<128x384xf32>
    %11 = tpu.matmul %10, %3, %cst {dimension_numbers = #tpu.dot_dimension_numbers<[1], [0], [0], [1], [0, 0, 1, 1], [], []>} : vector<128x64xbf16>, vector<64x384xbf16>, vector<128x384xf32> -> vector<128x384xf32>
    %12 = vector.broadcast %5 : vector<1x384xf32> to vector<128x384xf32>
    %13 = arith.addf %11, %12 : vector<128x384xf32>
    %14 = vector.shape_cast %13 : vector<128x384xf32> to vector<16x8x384xf32>
    %c0_11 = arith.constant 0 : index
    %c0_12 = arith.constant 0 : index
    %15 = vector.load %arg7[%c0_11, %c0_12] : memref<8x128xf32, #tpu.memory_space<vmem>>, vector<8x128xf32>
    %16 = vector.extract_strided_slice %14 {offsets = [0, 0, 0], sizes = [1, 8, 384], strides = [1, 1, 1]} : vector<16x8x384xf32> to vector<1x8x384xf32>
    %17 = vector.shape_cast %16 : vector<1x8x384xf32> to vector<8x384xf32>
    %18 = arith.truncf %15 : vector<8x128xf32> to vector<8x128xbf16>
    %cst_13 = arith.constant dense<0.000000e+00> : vector<8x384xf32>
    %19 = tpu.matmul %18, %4, %cst_13 {dimension_numbers = #tpu.dot_dimension_numbers<[1], [0], [0], [1], [0, 0, 1, 1], [], []>} : vector<8x128xbf16>, vector<128x384xbf16>, vector<8x384xf32> -> vector<8x384xf32>
    %20 = vector.extract_strided_slice %17 {offsets = [0, 0], sizes = [8, 256], strides = [1, 1]} : vector<8x384xf32> to vector<8x256xf32>
    %21 = vector.extract_strided_slice %19 {offsets = [0, 0], sizes = [8, 256], strides = [1, 1]} : vector<8x384xf32> to vector<8x256xf32>
    %22 = arith.addf %20, %21 : vector<8x256xf32>
    %23 = arith.negf %22 : vector<8x256xf32>
    %24 = math.exp %23 : vector<8x256xf32>
    %cst_14 = arith.constant 1.000000e+00 : f32
    %25 = vector.broadcast %cst_14 : f32 to vector<8x256xf32>
    %26 = arith.addf %25, %24 : vector<8x256xf32>
    %27 = arith.divf %25, %26 : vector<8x256xf32>
    %28 = vector.extract_strided_slice %27 {offsets = [0, 0], sizes = [8, 128], strides = [1, 1]} : vector<8x256xf32> to vector<8x128xf32>
    %29 = vector.extract_strided_slice %27 {offsets = [0, 128], sizes = [8, 128], strides = [1, 1]} : vector<8x256xf32> to vector<8x128xf32>
    %30 = vector.extract_strided_slice %17 {offsets = [0, 256], sizes = [8, 128], strides = [1, 1]} : vector<8x384xf32> to vector<8x128xf32>
    %31 = vector.extract_strided_slice %19 {offsets = [0, 256], sizes = [8, 128], strides = [1, 1]} : vector<8x384xf32> to vector<8x128xf32>
    %32 = arith.addf %31, %8 : vector<8x128xf32>
    %33 = arith.mulf %28, %32 : vector<8x128xf32>
    %34 = arith.addf %30, %33 : vector<8x128xf32>
    %35 = math.tanh %34 : vector<8x128xf32>
    %36 = arith.subf %15, %35 : vector<8x128xf32>
    %37 = arith.mulf %29, %36 : vector<8x128xf32>
    %38 = arith.addf %35, %37 : vector<8x128xf32>
    %c16_i32 = arith.constant 16 : i32
    %39 = arith.muli %arg1, %c16_i32 : i32
    %c0_i32_15 = arith.constant 0 : i32
    %40 = arith.addi %39, %c0_i32_15 : i32
    %c20_i32 = arith.constant 20 : i32
    %41 = arith.cmpi slt, %40, %c20_i32 : i32
    %42 = arith.select %41, %38, %15 : vector<8x128xf32>
    %43 = vector.extract_strided_slice %14 {offsets = [1, 0, 0], sizes = [1, 8, 384], strides = [1, 1, 1]} : vector<16x8x384xf32> to vector<1x8x384xf32>
    %44 = vector.shape_cast %43 : vector<1x8x384xf32> to vector<8x384xf32>
    %45 = arith.truncf %42 : vector<8x128xf32> to vector<8x128xbf16>
    %cst_16 = arith.constant dense<0.000000e+00> : vector<8x384xf32>
    %46 = tpu.matmul %45, %4, %cst_16 {dimension_numbers = #tpu.dot_dimension_numbers<[1], [0], [0], [1], [0, 0, 1, 1], [], []>} : vector<8x128xbf16>, vector<128x384xbf16>, vector<8x384xf32> -> vector<8x384xf32>
    %47 = vector.extract_strided_slice %44 {offsets = [0, 0], sizes = [8, 256], strides = [1, 1]} : vector<8x384xf32> to vector<8x256xf32>
    %48 = vector.extract_strided_slice %46 {offsets = [0, 0], sizes = [8, 256], strides = [1, 1]} : vector<8x384xf32> to vector<8x256xf32>
    %49 = arith.addf %47, %48 : vector<8x256xf32>
    %50 = arith.negf %49 : vector<8x256xf32>
    %51 = math.exp %50 : vector<8x256xf32>
    %cst_17 = arith.constant 1.000000e+00 : f32
    %52 = vector.broadcast %cst_17 : f32 to vector<8x256xf32>
    %53 = arith.addf %52, %51 : vector<8x256xf32>
    %54 = arith.divf %52, %53 : vector<8x256xf32>
    %55 = vector.extract_strided_slice %54 {offsets = [0, 0], sizes = [8, 128], strides = [1, 1]} : vector<8x256xf32> to vector<8x128xf32>
    %56 = vector.extract_strided_slice %54 {offsets = [0, 128], sizes = [8, 128], strides = [1, 1]} : vector<8x256xf32> to vector<8x128xf32>
    %57 = vector.extract_strided_slice %44 {offsets = [0, 256], sizes = [8, 128], strides = [1, 1]} : vector<8x384xf32> to vector<8x128xf32>
    %58 = vector.extract_strided_slice %46 {offsets = [0, 256], sizes = [8, 128], strides = [1, 1]} : vector<8x384xf32> to vector<8x128xf32>
    %59 = arith.addf %58, %8 : vector<8x128xf32>
    %60 = arith.mulf %55, %59 : vector<8x128xf32>
    %61 = arith.addf %57, %60 : vector<8x128xf32>
    %62 = math.tanh %61 : vector<8x128xf32>
    %63 = arith.subf %42, %62 : vector<8x128xf32>
    %64 = arith.mulf %56, %63 : vector<8x128xf32>
    %65 = arith.addf %62, %64 : vector<8x128xf32>
    %c16_i32_18 = arith.constant 16 : i32
    %66 = arith.muli %arg1, %c16_i32_18 : i32
    %c1_i32 = arith.constant 1 : i32
    %67 = arith.addi %66, %c1_i32 : i32
    %c20_i32_19 = arith.constant 20 : i32
    %68 = arith.cmpi slt, %67, %c20_i32_19 : i32
    %69 = arith.select %68, %65, %42 : vector<8x128xf32>
    %70 = vector.extract_strided_slice %14 {offsets = [2, 0, 0], sizes = [1, 8, 384], strides = [1, 1, 1]} : vector<16x8x384xf32> to vector<1x8x384xf32>
    %71 = vector.shape_cast %70 : vector<1x8x384xf32> to vector<8x384xf32>
    %72 = arith.truncf %69 : vector<8x128xf32> to vector<8x128xbf16>
    %cst_20 = arith.constant dense<0.000000e+00> : vector<8x384xf32>
    %73 = tpu.matmul %72, %4, %cst_20 {dimension_numbers = #tpu.dot_dimension_numbers<[1], [0], [0], [1], [0, 0, 1, 1], [], []>} : vector<8x128xbf16>, vector<128x384xbf16>, vector<8x384xf32> -> vector<8x384xf32>
    %74 = vector.extract_strided_slice %71 {offsets = [0, 0], sizes = [8, 256], strides = [1, 1]} : vector<8x384xf32> to vector<8x256xf32>
    %75 = vector.extract_strided_slice %73 {offsets = [0, 0], sizes = [8, 256], strides = [1, 1]} : vector<8x384xf32> to vector<8x256xf32>
    %76 = arith.addf %74, %75 : vector<8x256xf32>
    %77 = arith.negf %76 : vector<8x256xf32>
    %78 = math.exp %77 : vector<8x256xf32>
    %cst_21 = arith.constant 1.000000e+00 : f32
    %79 = vector.broadcast %cst_21 : f32 to vector<8x256xf32>
    %80 = arith.addf %79, %78 : vector<8x256xf32>
    %81 = arith.divf %79, %80 : vector<8x256xf32>
    %82 = vector.extract_strided_slice %81 {offsets = [0, 0], sizes = [8, 128], strides = [1, 1]} : vector<8x256xf32> to vector<8x128xf32>
    %83 = vector.extract_strided_slice %81 {offsets = [0, 128], sizes = [8, 128], strides = [1, 1]} : vector<8x256xf32> to vector<8x128xf32>
    %84 = vector.extract_strided_slice %71 {offsets = [0, 256], sizes = [8, 128], strides = [1, 1]} : vector<8x384xf32> to vector<8x128xf32>
    %85 = vector.extract_strided_slice %73 {offsets = [0, 256], sizes = [8, 128], strides = [1, 1]} : vector<8x384xf32> to vector<8x128xf32>
    %86 = arith.addf %85, %8 : vector<8x128xf32>
    %87 = arith.mulf %82, %86 : vector<8x128xf32>
    %88 = arith.addf %84, %87 : vector<8x128xf32>
    %89 = math.tanh %88 : vector<8x128xf32>
    %90 = arith.subf %69, %89 : vector<8x128xf32>
    %91 = arith.mulf %83, %90 : vector<8x128xf32>
    %92 = arith.addf %89, %91 : vector<8x128xf32>
    %c16_i32_22 = arith.constant 16 : i32
    %93 = arith.muli %arg1, %c16_i32_22 : i32
    %c2_i32 = arith.constant 2 : i32
    %94 = arith.addi %93, %c2_i32 : i32
    %c20_i32_23 = arith.constant 20 : i32
    %95 = arith.cmpi slt, %94, %c20_i32_23 : i32
    %96 = arith.select %95, %92, %69 : vector<8x128xf32>
    %97 = vector.extract_strided_slice %14 {offsets = [3, 0, 0], sizes = [1, 8, 384], strides = [1, 1, 1]} : vector<16x8x384xf32> to vector<1x8x384xf32>
    %98 = vector.shape_cast %97 : vector<1x8x384xf32> to vector<8x384xf32>
    %99 = arith.truncf %96 : vector<8x128xf32> to vector<8x128xbf16>
    %cst_24 = arith.constant dense<0.000000e+00> : vector<8x384xf32>
    %100 = tpu.matmul %99, %4, %cst_24 {dimension_numbers = #tpu.dot_dimension_numbers<[1], [0], [0], [1], [0, 0, 1, 1], [], []>} : vector<8x128xbf16>, vector<128x384xbf16>, vector<8x384xf32> -> vector<8x384xf32>
    %101 = vector.extract_strided_slice %98 {offsets = [0, 0], sizes = [8, 256], strides = [1, 1]} : vector<8x384xf32> to vector<8x256xf32>
    %102 = vector.extract_strided_slice %100 {offsets = [0, 0], sizes = [8, 256], strides = [1, 1]} : vector<8x384xf32> to vector<8x256xf32>
    %103 = arith.addf %101, %102 : vector<8x256xf32>
    %104 = arith.negf %103 : vector<8x256xf32>
    %105 = math.exp %104 : vector<8x256xf32>
    %cst_25 = arith.constant 1.000000e+00 : f32
    %106 = vector.broadcast %cst_25 : f32 to vector<8x256xf32>
    %107 = arith.addf %106, %105 : vector<8x256xf32>
    %108 = arith.divf %106, %107 : vector<8x256xf32>
    %109 = vector.extract_strided_slice %108 {offsets = [0, 0], sizes = [8, 128], strides = [1, 1]} : vector<8x256xf32> to vector<8x128xf32>
    %110 = vector.extract_strided_slice %108 {offsets = [0, 128], sizes = [8, 128], strides = [1, 1]} : vector<8x256xf32> to vector<8x128xf32>
    %111 = vector.extract_strided_slice %98 {offsets = [0, 256], sizes = [8, 128], strides = [1, 1]} : vector<8x384xf32> to vector<8x128xf32>
    %112 = vector.extract_strided_slice %100 {offsets = [0, 256], sizes = [8, 128], strides = [1, 1]} : vector<8x384xf32> to vector<8x128xf32>
    %113 = arith.addf %112, %8 : vector<8x128xf32>
    %114 = arith.mulf %109, %113 : vector<8x128xf32>
    %115 = arith.addf %111, %114 : vector<8x128xf32>
    %116 = math.tanh %115 : vector<8x128xf32>
    %117 = arith.subf %96, %116 : vector<8x128xf32>
    %118 = arith.mulf %110, %117 : vector<8x128xf32>
    %119 = arith.addf %116, %118 : vector<8x128xf32>
    %c16_i32_26 = arith.constant 16 : i32
    %120 = arith.muli %arg1, %c16_i32_26 : i32
    %c3_i32 = arith.constant 3 : i32
    %121 = arith.addi %120, %c3_i32 : i32
    %c20_i32_27 = arith.constant 20 : i32
    %122 = arith.cmpi slt, %121, %c20_i32_27 : i32
    %123 = arith.select %122, %119, %96 : vector<8x128xf32>
    %124 = vector.extract_strided_slice %14 {offsets = [4, 0, 0], sizes = [1, 8, 384], strides = [1, 1, 1]} : vector<16x8x384xf32> to vector<1x8x384xf32>
    %125 = vector.shape_cast %124 : vector<1x8x384xf32> to vector<8x384xf32>
    %126 = arith.truncf %123 : vector<8x128xf32> to vector<8x128xbf16>
    %cst_28 = arith.constant dense<0.000000e+00> : vector<8x384xf32>
    %127 = tpu.matmul %126, %4, %cst_28 {dimension_numbers = #tpu.dot_dimension_numbers<[1], [0], [0], [1], [0, 0, 1, 1], [], []>} : vector<8x128xbf16>, vector<128x384xbf16>, vector<8x384xf32> -> vector<8x384xf32>
    %128 = vector.extract_strided_slice %125 {offsets = [0, 0], sizes = [8, 256], strides = [1, 1]} : vector<8x384xf32> to vector<8x256xf32>
    %129 = vector.extract_strided_slice %127 {offsets = [0, 0], sizes = [8, 256], strides = [1, 1]} : vector<8x384xf32> to vector<8x256xf32>
    %130 = arith.addf %128, %129 : vector<8x256xf32>
    %131 = arith.negf %130 : vector<8x256xf32>
    %132 = math.exp %131 : vector<8x256xf32>
    %cst_29 = arith.constant 1.000000e+00 : f32
    %133 = vector.broadcast %cst_29 : f32 to vector<8x256xf32>
    %134 = arith.addf %133, %132 : vector<8x256xf32>
    %135 = arith.divf %133, %134 : vector<8x256xf32>
    %136 = vector.extract_strided_slice %135 {offsets = [0, 0], sizes = [8, 128], strides = [1, 1]} : vector<8x256xf32> to vector<8x128xf32>
    %137 = vector.extract_strided_slice %135 {offsets = [0, 128], sizes = [8, 128], strides = [1, 1]} : vector<8x256xf32> to vector<8x128xf32>
    %138 = vector.extract_strided_slice %125 {offsets = [0, 256], sizes = [8, 128], strides = [1, 1]} : vector<8x384xf32> to vector<8x128xf32>
    %139 = vector.extract_strided_slice %127 {offsets = [0, 256], sizes = [8, 128], strides = [1, 1]} : vector<8x384xf32> to vector<8x128xf32>
    %140 = arith.addf %139, %8 : vector<8x128xf32>
    %141 = arith.mulf %136, %140 : vector<8x128xf32>
    %142 = arith.addf %138, %141 : vector<8x128xf32>
    %143 = math.tanh %142 : vector<8x128xf32>
    %144 = arith.subf %123, %143 : vector<8x128xf32>
    %145 = arith.mulf %137, %144 : vector<8x128xf32>
    %146 = arith.addf %143, %145 : vector<8x128xf32>
    %c16_i32_30 = arith.constant 16 : i32
    %147 = arith.muli %arg1, %c16_i32_30 : i32
    %c4_i32 = arith.constant 4 : i32
    %148 = arith.addi %147, %c4_i32 : i32
    %c20_i32_31 = arith.constant 20 : i32
    %149 = arith.cmpi slt, %148, %c20_i32_31 : i32
    %150 = arith.select %149, %146, %123 : vector<8x128xf32>
    %151 = vector.extract_strided_slice %14 {offsets = [5, 0, 0], sizes = [1, 8, 384], strides = [1, 1, 1]} : vector<16x8x384xf32> to vector<1x8x384xf32>
    %152 = vector.shape_cast %151 : vector<1x8x384xf32> to vector<8x384xf32>
    %153 = arith.truncf %150 : vector<8x128xf32> to vector<8x128xbf16>
    %cst_32 = arith.constant dense<0.000000e+00> : vector<8x384xf32>
    %154 = tpu.matmul %153, %4, %cst_32 {dimension_numbers = #tpu.dot_dimension_numbers<[1], [0], [0], [1], [0, 0, 1, 1], [], []>} : vector<8x128xbf16>, vector<128x384xbf16>, vector<8x384xf32> -> vector<8x384xf32>
    %155 = vector.extract_strided_slice %152 {offsets = [0, 0], sizes = [8, 256], strides = [1, 1]} : vector<8x384xf32> to vector<8x256xf32>
    %156 = vector.extract_strided_slice %154 {offsets = [0, 0], sizes = [8, 256], strides = [1, 1]} : vector<8x384xf32> to vector<8x256xf32>
    %157 = arith.addf %155, %156 : vector<8x256xf32>
    %158 = arith.negf %157 : vector<8x256xf32>
    %159 = math.exp %158 : vector<8x256xf32>
    %cst_33 = arith.constant 1.000000e+00 : f32
    %160 = vector.broadcast %cst_33 : f32 to vector<8x256xf32>
    %161 = arith.addf %160, %159 : vector<8x256xf32>
    %162 = arith.divf %160, %161 : vector<8x256xf32>
    %163 = vector.extract_strided_slice %162 {offsets = [0, 0], sizes = [8, 128], strides = [1, 1]} : vector<8x256xf32> to vector<8x128xf32>
    %164 = vector.extract_strided_slice %162 {offsets = [0, 128], sizes = [8, 128], strides = [1, 1]} : vector<8x256xf32> to vector<8x128xf32>
    %165 = vector.extract_strided_slice %152 {offsets = [0, 256], sizes = [8, 128], strides = [1, 1]} : vector<8x384xf32> to vector<8x128xf32>
    %166 = vector.extract_strided_slice %154 {offsets = [0, 256], sizes = [8, 128], strides = [1, 1]} : vector<8x384xf32> to vector<8x128xf32>
    %167 = arith.addf %166, %8 : vector<8x128xf32>
    %168 = arith.mulf %163, %167 : vector<8x128xf32>
    %169 = arith.addf %165, %168 : vector<8x128xf32>
    %170 = math.tanh %169 : vector<8x128xf32>
    %171 = arith.subf %150, %170 : vector<8x128xf32>
    %172 = arith.mulf %164, %171 : vector<8x128xf32>
    %173 = arith.addf %170, %172 : vector<8x128xf32>
    %c16_i32_34 = arith.constant 16 : i32
    %174 = arith.muli %arg1, %c16_i32_34 : i32
    %c5_i32 = arith.constant 5 : i32
    %175 = arith.addi %174, %c5_i32 : i32
    %c20_i32_35 = arith.constant 20 : i32
    %176 = arith.cmpi slt, %175, %c20_i32_35 : i32
    %177 = arith.select %176, %173, %150 : vector<8x128xf32>
    %178 = vector.extract_strided_slice %14 {offsets = [6, 0, 0], sizes = [1, 8, 384], strides = [1, 1, 1]} : vector<16x8x384xf32> to vector<1x8x384xf32>
    %179 = vector.shape_cast %178 : vector<1x8x384xf32> to vector<8x384xf32>
    %180 = arith.truncf %177 : vector<8x128xf32> to vector<8x128xbf16>
    %cst_36 = arith.constant dense<0.000000e+00> : vector<8x384xf32>
    %181 = tpu.matmul %180, %4, %cst_36 {dimension_numbers = #tpu.dot_dimension_numbers<[1], [0], [0], [1], [0, 0, 1, 1], [], []>} : vector<8x128xbf16>, vector<128x384xbf16>, vector<8x384xf32> -> vector<8x384xf32>
    %182 = vector.extract_strided_slice %179 {offsets = [0, 0], sizes = [8, 256], strides = [1, 1]} : vector<8x384xf32> to vector<8x256xf32>
    %183 = vector.extract_strided_slice %181 {offsets = [0, 0], sizes = [8, 256], strides = [1, 1]} : vector<8x384xf32> to vector<8x256xf32>
    %184 = arith.addf %182, %183 : vector<8x256xf32>
    %185 = arith.negf %184 : vector<8x256xf32>
    %186 = math.exp %185 : vector<8x256xf32>
    %cst_37 = arith.constant 1.000000e+00 : f32
    %187 = vector.broadcast %cst_37 : f32 to vector<8x256xf32>
    %188 = arith.addf %187, %186 : vector<8x256xf32>
    %189 = arith.divf %187, %188 : vector<8x256xf32>
    %190 = vector.extract_strided_slice %189 {offsets = [0, 0], sizes = [8, 128], strides = [1, 1]} : vector<8x256xf32> to vector<8x128xf32>
    %191 = vector.extract_strided_slice %189 {offsets = [0, 128], sizes = [8, 128], strides = [1, 1]} : vector<8x256xf32> to vector<8x128xf32>
    %192 = vector.extract_strided_slice %179 {offsets = [0, 256], sizes = [8, 128], strides = [1, 1]} : vector<8x384xf32> to vector<8x128xf32>
    %193 = vector.extract_strided_slice %181 {offsets = [0, 256], sizes = [8, 128], strides = [1, 1]} : vector<8x384xf32> to vector<8x128xf32>
    %194 = arith.addf %193, %8 : vector<8x128xf32>
    %195 = arith.mulf %190, %194 : vector<8x128xf32>
    %196 = arith.addf %192, %195 : vector<8x128xf32>
    %197 = math.tanh %196 : vector<8x128xf32>
    %198 = arith.subf %177, %197 : vector<8x128xf32>
    %199 = arith.mulf %191, %198 : vector<8x128xf32>
    %200 = arith.addf %197, %199 : vector<8x128xf32>
    %c16_i32_38 = arith.constant 16 : i32
    %201 = arith.muli %arg1, %c16_i32_38 : i32
    %c6_i32 = arith.constant 6 : i32
    %202 = arith.addi %201, %c6_i32 : i32
    %c20_i32_39 = arith.constant 20 : i32
    %203 = arith.cmpi slt, %202, %c20_i32_39 : i32
    %204 = arith.select %203, %200, %177 : vector<8x128xf32>
    %205 = vector.extract_strided_slice %14 {offsets = [7, 0, 0], sizes = [1, 8, 384], strides = [1, 1, 1]} : vector<16x8x384xf32> to vector<1x8x384xf32>
    %206 = vector.shape_cast %205 : vector<1x8x384xf32> to vector<8x384xf32>
    %207 = arith.truncf %204 : vector<8x128xf32> to vector<8x128xbf16>
    %cst_40 = arith.constant dense<0.000000e+00> : vector<8x384xf32>
    %208 = tpu.matmul %207, %4, %cst_40 {dimension_numbers = #tpu.dot_dimension_numbers<[1], [0], [0], [1], [0, 0, 1, 1], [], []>} : vector<8x128xbf16>, vector<128x384xbf16>, vector<8x384xf32> -> vector<8x384xf32>
    %209 = vector.extract_strided_slice %206 {offsets = [0, 0], sizes = [8, 256], strides = [1, 1]} : vector<8x384xf32> to vector<8x256xf32>
    %210 = vector.extract_strided_slice %208 {offsets = [0, 0], sizes = [8, 256], strides = [1, 1]} : vector<8x384xf32> to vector<8x256xf32>
    %211 = arith.addf %209, %210 : vector<8x256xf32>
    %212 = arith.negf %211 : vector<8x256xf32>
    %213 = math.exp %212 : vector<8x256xf32>
    %cst_41 = arith.constant 1.000000e+00 : f32
    %214 = vector.broadcast %cst_41 : f32 to vector<8x256xf32>
    %215 = arith.addf %214, %213 : vector<8x256xf32>
    %216 = arith.divf %214, %215 : vector<8x256xf32>
    %217 = vector.extract_strided_slice %216 {offsets = [0, 0], sizes = [8, 128], strides = [1, 1]} : vector<8x256xf32> to vector<8x128xf32>
    %218 = vector.extract_strided_slice %216 {offsets = [0, 128], sizes = [8, 128], strides = [1, 1]} : vector<8x256xf32> to vector<8x128xf32>
    %219 = vector.extract_strided_slice %206 {offsets = [0, 256], sizes = [8, 128], strides = [1, 1]} : vector<8x384xf32> to vector<8x128xf32>
    %220 = vector.extract_strided_slice %208 {offsets = [0, 256], sizes = [8, 128], strides = [1, 1]} : vector<8x384xf32> to vector<8x128xf32>
    %221 = arith.addf %220, %8 : vector<8x128xf32>
    %222 = arith.mulf %217, %221 : vector<8x128xf32>
    %223 = arith.addf %219, %222 : vector<8x128xf32>
    %224 = math.tanh %223 : vector<8x128xf32>
    %225 = arith.subf %204, %224 : vector<8x128xf32>
    %226 = arith.mulf %218, %225 : vector<8x128xf32>
    %227 = arith.addf %224, %226 : vector<8x128xf32>
    %c16_i32_42 = arith.constant 16 : i32
    %228 = arith.muli %arg1, %c16_i32_42 : i32
    %c7_i32 = arith.constant 7 : i32
    %229 = arith.addi %228, %c7_i32 : i32
    %c20_i32_43 = arith.constant 20 : i32
    %230 = arith.cmpi slt, %229, %c20_i32_43 : i32
    %231 = arith.select %230, %227, %204 : vector<8x128xf32>
    %232 = vector.extract_strided_slice %14 {offsets = [8, 0, 0], sizes = [1, 8, 384], strides = [1, 1, 1]} : vector<16x8x384xf32> to vector<1x8x384xf32>
    %233 = vector.shape_cast %232 : vector<1x8x384xf32> to vector<8x384xf32>
    %234 = arith.truncf %231 : vector<8x128xf32> to vector<8x128xbf16>
    %cst_44 = arith.constant dense<0.000000e+00> : vector<8x384xf32>
    %235 = tpu.matmul %234, %4, %cst_44 {dimension_numbers = #tpu.dot_dimension_numbers<[1], [0], [0], [1], [0, 0, 1, 1], [], []>} : vector<8x128xbf16>, vector<128x384xbf16>, vector<8x384xf32> -> vector<8x384xf32>
    %236 = vector.extract_strided_slice %233 {offsets = [0, 0], sizes = [8, 256], strides = [1, 1]} : vector<8x384xf32> to vector<8x256xf32>
    %237 = vector.extract_strided_slice %235 {offsets = [0, 0], sizes = [8, 256], strides = [1, 1]} : vector<8x384xf32> to vector<8x256xf32>
    %238 = arith.addf %236, %237 : vector<8x256xf32>
    %239 = arith.negf %238 : vector<8x256xf32>
    %240 = math.exp %239 : vector<8x256xf32>
    %cst_45 = arith.constant 1.000000e+00 : f32
    %241 = vector.broadcast %cst_45 : f32 to vector<8x256xf32>
    %242 = arith.addf %241, %240 : vector<8x256xf32>
    %243 = arith.divf %241, %242 : vector<8x256xf32>
    %244 = vector.extract_strided_slice %243 {offsets = [0, 0], sizes = [8, 128], strides = [1, 1]} : vector<8x256xf32> to vector<8x128xf32>
    %245 = vector.extract_strided_slice %243 {offsets = [0, 128], sizes = [8, 128], strides = [1, 1]} : vector<8x256xf32> to vector<8x128xf32>
    %246 = vector.extract_strided_slice %233 {offsets = [0, 256], sizes = [8, 128], strides = [1, 1]} : vector<8x384xf32> to vector<8x128xf32>
    %247 = vector.extract_strided_slice %235 {offsets = [0, 256], sizes = [8, 128], strides = [1, 1]} : vector<8x384xf32> to vector<8x128xf32>
    %248 = arith.addf %247, %8 : vector<8x128xf32>
    %249 = arith.mulf %244, %248 : vector<8x128xf32>
    %250 = arith.addf %246, %249 : vector<8x128xf32>
    %251 = math.tanh %250 : vector<8x128xf32>
    %252 = arith.subf %231, %251 : vector<8x128xf32>
    %253 = arith.mulf %245, %252 : vector<8x128xf32>
    %254 = arith.addf %251, %253 : vector<8x128xf32>
    %c16_i32_46 = arith.constant 16 : i32
    %255 = arith.muli %arg1, %c16_i32_46 : i32
    %c8_i32 = arith.constant 8 : i32
    %256 = arith.addi %255, %c8_i32 : i32
    %c20_i32_47 = arith.constant 20 : i32
    %257 = arith.cmpi slt, %256, %c20_i32_47 : i32
    %258 = arith.select %257, %254, %231 : vector<8x128xf32>
    %259 = vector.extract_strided_slice %14 {offsets = [9, 0, 0], sizes = [1, 8, 384], strides = [1, 1, 1]} : vector<16x8x384xf32> to vector<1x8x384xf32>
    %260 = vector.shape_cast %259 : vector<1x8x384xf32> to vector<8x384xf32>
    %261 = arith.truncf %258 : vector<8x128xf32> to vector<8x128xbf16>
    %cst_48 = arith.constant dense<0.000000e+00> : vector<8x384xf32>
    %262 = tpu.matmul %261, %4, %cst_48 {dimension_numbers = #tpu.dot_dimension_numbers<[1], [0], [0], [1], [0, 0, 1, 1], [], []>} : vector<8x128xbf16>, vector<128x384xbf16>, vector<8x384xf32> -> vector<8x384xf32>
    %263 = vector.extract_strided_slice %260 {offsets = [0, 0], sizes = [8, 256], strides = [1, 1]} : vector<8x384xf32> to vector<8x256xf32>
    %264 = vector.extract_strided_slice %262 {offsets = [0, 0], sizes = [8, 256], strides = [1, 1]} : vector<8x384xf32> to vector<8x256xf32>
    %265 = arith.addf %263, %264 : vector<8x256xf32>
    %266 = arith.negf %265 : vector<8x256xf32>
    %267 = math.exp %266 : vector<8x256xf32>
    %cst_49 = arith.constant 1.000000e+00 : f32
    %268 = vector.broadcast %cst_49 : f32 to vector<8x256xf32>
    %269 = arith.addf %268, %267 : vector<8x256xf32>
    %270 = arith.divf %268, %269 : vector<8x256xf32>
    %271 = vector.extract_strided_slice %270 {offsets = [0, 0], sizes = [8, 128], strides = [1, 1]} : vector<8x256xf32> to vector<8x128xf32>
    %272 = vector.extract_strided_slice %270 {offsets = [0, 128], sizes = [8, 128], strides = [1, 1]} : vector<8x256xf32> to vector<8x128xf32>
    %273 = vector.extract_strided_slice %260 {offsets = [0, 256], sizes = [8, 128], strides = [1, 1]} : vector<8x384xf32> to vector<8x128xf32>
    %274 = vector.extract_strided_slice %262 {offsets = [0, 256], sizes = [8, 128], strides = [1, 1]} : vector<8x384xf32> to vector<8x128xf32>
    %275 = arith.addf %274, %8 : vector<8x128xf32>
    %276 = arith.mulf %271, %275 : vector<8x128xf32>
    %277 = arith.addf %273, %276 : vector<8x128xf32>
    %278 = math.tanh %277 : vector<8x128xf32>
    %279 = arith.subf %258, %278 : vector<8x128xf32>
    %280 = arith.mulf %272, %279 : vector<8x128xf32>
    %281 = arith.addf %278, %280 : vector<8x128xf32>
    %c16_i32_50 = arith.constant 16 : i32
    %282 = arith.muli %arg1, %c16_i32_50 : i32
    %c9_i32 = arith.constant 9 : i32
    %283 = arith.addi %282, %c9_i32 : i32
    %c20_i32_51 = arith.constant 20 : i32
    %284 = arith.cmpi slt, %283, %c20_i32_51 : i32
    %285 = arith.select %284, %281, %258 : vector<8x128xf32>
    %286 = vector.extract_strided_slice %14 {offsets = [10, 0, 0], sizes = [1, 8, 384], strides = [1, 1, 1]} : vector<16x8x384xf32> to vector<1x8x384xf32>
    %287 = vector.shape_cast %286 : vector<1x8x384xf32> to vector<8x384xf32>
    %288 = arith.truncf %285 : vector<8x128xf32> to vector<8x128xbf16>
    %cst_52 = arith.constant dense<0.000000e+00> : vector<8x384xf32>
    %289 = tpu.matmul %288, %4, %cst_52 {dimension_numbers = #tpu.dot_dimension_numbers<[1], [0], [0], [1], [0, 0, 1, 1], [], []>} : vector<8x128xbf16>, vector<128x384xbf16>, vector<8x384xf32> -> vector<8x384xf32>
    %290 = vector.extract_strided_slice %287 {offsets = [0, 0], sizes = [8, 256], strides = [1, 1]} : vector<8x384xf32> to vector<8x256xf32>
    %291 = vector.extract_strided_slice %289 {offsets = [0, 0], sizes = [8, 256], strides = [1, 1]} : vector<8x384xf32> to vector<8x256xf32>
    %292 = arith.addf %290, %291 : vector<8x256xf32>
    %293 = arith.negf %292 : vector<8x256xf32>
    %294 = math.exp %293 : vector<8x256xf32>
    %cst_53 = arith.constant 1.000000e+00 : f32
    %295 = vector.broadcast %cst_53 : f32 to vector<8x256xf32>
    %296 = arith.addf %295, %294 : vector<8x256xf32>
    %297 = arith.divf %295, %296 : vector<8x256xf32>
    %298 = vector.extract_strided_slice %297 {offsets = [0, 0], sizes = [8, 128], strides = [1, 1]} : vector<8x256xf32> to vector<8x128xf32>
    %299 = vector.extract_strided_slice %297 {offsets = [0, 128], sizes = [8, 128], strides = [1, 1]} : vector<8x256xf32> to vector<8x128xf32>
    %300 = vector.extract_strided_slice %287 {offsets = [0, 256], sizes = [8, 128], strides = [1, 1]} : vector<8x384xf32> to vector<8x128xf32>
    %301 = vector.extract_strided_slice %289 {offsets = [0, 256], sizes = [8, 128], strides = [1, 1]} : vector<8x384xf32> to vector<8x128xf32>
    %302 = arith.addf %301, %8 : vector<8x128xf32>
    %303 = arith.mulf %298, %302 : vector<8x128xf32>
    %304 = arith.addf %300, %303 : vector<8x128xf32>
    %305 = math.tanh %304 : vector<8x128xf32>
    %306 = arith.subf %285, %305 : vector<8x128xf32>
    %307 = arith.mulf %299, %306 : vector<8x128xf32>
    %308 = arith.addf %305, %307 : vector<8x128xf32>
    %c16_i32_54 = arith.constant 16 : i32
    %309 = arith.muli %arg1, %c16_i32_54 : i32
    %c10_i32 = arith.constant 10 : i32
    %310 = arith.addi %309, %c10_i32 : i32
    %c20_i32_55 = arith.constant 20 : i32
    %311 = arith.cmpi slt, %310, %c20_i32_55 : i32
    %312 = arith.select %311, %308, %285 : vector<8x128xf32>
    %313 = vector.extract_strided_slice %14 {offsets = [11, 0, 0], sizes = [1, 8, 384], strides = [1, 1, 1]} : vector<16x8x384xf32> to vector<1x8x384xf32>
    %314 = vector.shape_cast %313 : vector<1x8x384xf32> to vector<8x384xf32>
    %315 = arith.truncf %312 : vector<8x128xf32> to vector<8x128xbf16>
    %cst_56 = arith.constant dense<0.000000e+00> : vector<8x384xf32>
    %316 = tpu.matmul %315, %4, %cst_56 {dimension_numbers = #tpu.dot_dimension_numbers<[1], [0], [0], [1], [0, 0, 1, 1], [], []>} : vector<8x128xbf16>, vector<128x384xbf16>, vector<8x384xf32> -> vector<8x384xf32>
    %317 = vector.extract_strided_slice %314 {offsets = [0, 0], sizes = [8, 256], strides = [1, 1]} : vector<8x384xf32> to vector<8x256xf32>
    %318 = vector.extract_strided_slice %316 {offsets = [0, 0], sizes = [8, 256], strides = [1, 1]} : vector<8x384xf32> to vector<8x256xf32>
    %319 = arith.addf %317, %318 : vector<8x256xf32>
    %320 = arith.negf %319 : vector<8x256xf32>
    %321 = math.exp %320 : vector<8x256xf32>
    %cst_57 = arith.constant 1.000000e+00 : f32
    %322 = vector.broadcast %cst_57 : f32 to vector<8x256xf32>
    %323 = arith.addf %322, %321 : vector<8x256xf32>
    %324 = arith.divf %322, %323 : vector<8x256xf32>
    %325 = vector.extract_strided_slice %324 {offsets = [0, 0], sizes = [8, 128], strides = [1, 1]} : vector<8x256xf32> to vector<8x128xf32>
    %326 = vector.extract_strided_slice %324 {offsets = [0, 128], sizes = [8, 128], strides = [1, 1]} : vector<8x256xf32> to vector<8x128xf32>
    %327 = vector.extract_strided_slice %314 {offsets = [0, 256], sizes = [8, 128], strides = [1, 1]} : vector<8x384xf32> to vector<8x128xf32>
    %328 = vector.extract_strided_slice %316 {offsets = [0, 256], sizes = [8, 128], strides = [1, 1]} : vector<8x384xf32> to vector<8x128xf32>
    %329 = arith.addf %328, %8 : vector<8x128xf32>
    %330 = arith.mulf %325, %329 : vector<8x128xf32>
    %331 = arith.addf %327, %330 : vector<8x128xf32>
    %332 = math.tanh %331 : vector<8x128xf32>
    %333 = arith.subf %312, %332 : vector<8x128xf32>
    %334 = arith.mulf %326, %333 : vector<8x128xf32>
    %335 = arith.addf %332, %334 : vector<8x128xf32>
    %c16_i32_58 = arith.constant 16 : i32
    %336 = arith.muli %arg1, %c16_i32_58 : i32
    %c11_i32 = arith.constant 11 : i32
    %337 = arith.addi %336, %c11_i32 : i32
    %c20_i32_59 = arith.constant 20 : i32
    %338 = arith.cmpi slt, %337, %c20_i32_59 : i32
    %339 = arith.select %338, %335, %312 : vector<8x128xf32>
    %340 = vector.extract_strided_slice %14 {offsets = [12, 0, 0], sizes = [1, 8, 384], strides = [1, 1, 1]} : vector<16x8x384xf32> to vector<1x8x384xf32>
    %341 = vector.shape_cast %340 : vector<1x8x384xf32> to vector<8x384xf32>
    %342 = arith.truncf %339 : vector<8x128xf32> to vector<8x128xbf16>
    %cst_60 = arith.constant dense<0.000000e+00> : vector<8x384xf32>
    %343 = tpu.matmul %342, %4, %cst_60 {dimension_numbers = #tpu.dot_dimension_numbers<[1], [0], [0], [1], [0, 0, 1, 1], [], []>} : vector<8x128xbf16>, vector<128x384xbf16>, vector<8x384xf32> -> vector<8x384xf32>
    %344 = vector.extract_strided_slice %341 {offsets = [0, 0], sizes = [8, 256], strides = [1, 1]} : vector<8x384xf32> to vector<8x256xf32>
    %345 = vector.extract_strided_slice %343 {offsets = [0, 0], sizes = [8, 256], strides = [1, 1]} : vector<8x384xf32> to vector<8x256xf32>
    %346 = arith.addf %344, %345 : vector<8x256xf32>
    %347 = arith.negf %346 : vector<8x256xf32>
    %348 = math.exp %347 : vector<8x256xf32>
    %cst_61 = arith.constant 1.000000e+00 : f32
    %349 = vector.broadcast %cst_61 : f32 to vector<8x256xf32>
    %350 = arith.addf %349, %348 : vector<8x256xf32>
    %351 = arith.divf %349, %350 : vector<8x256xf32>
    %352 = vector.extract_strided_slice %351 {offsets = [0, 0], sizes = [8, 128], strides = [1, 1]} : vector<8x256xf32> to vector<8x128xf32>
    %353 = vector.extract_strided_slice %351 {offsets = [0, 128], sizes = [8, 128], strides = [1, 1]} : vector<8x256xf32> to vector<8x128xf32>
    %354 = vector.extract_strided_slice %341 {offsets = [0, 256], sizes = [8, 128], strides = [1, 1]} : vector<8x384xf32> to vector<8x128xf32>
    %355 = vector.extract_strided_slice %343 {offsets = [0, 256], sizes = [8, 128], strides = [1, 1]} : vector<8x384xf32> to vector<8x128xf32>
    %356 = arith.addf %355, %8 : vector<8x128xf32>
    %357 = arith.mulf %352, %356 : vector<8x128xf32>
    %358 = arith.addf %354, %357 : vector<8x128xf32>
    %359 = math.tanh %358 : vector<8x128xf32>
    %360 = arith.subf %339, %359 : vector<8x128xf32>
    %361 = arith.mulf %353, %360 : vector<8x128xf32>
    %362 = arith.addf %359, %361 : vector<8x128xf32>
    %c16_i32_62 = arith.constant 16 : i32
    %363 = arith.muli %arg1, %c16_i32_62 : i32
    %c12_i32 = arith.constant 12 : i32
    %364 = arith.addi %363, %c12_i32 : i32
    %c20_i32_63 = arith.constant 20 : i32
    %365 = arith.cmpi slt, %364, %c20_i32_63 : i32
    %366 = arith.select %365, %362, %339 : vector<8x128xf32>
    %367 = vector.extract_strided_slice %14 {offsets = [13, 0, 0], sizes = [1, 8, 384], strides = [1, 1, 1]} : vector<16x8x384xf32> to vector<1x8x384xf32>
    %368 = vector.shape_cast %367 : vector<1x8x384xf32> to vector<8x384xf32>
    %369 = arith.truncf %366 : vector<8x128xf32> to vector<8x128xbf16>
    %cst_64 = arith.constant dense<0.000000e+00> : vector<8x384xf32>
    %370 = tpu.matmul %369, %4, %cst_64 {dimension_numbers = #tpu.dot_dimension_numbers<[1], [0], [0], [1], [0, 0, 1, 1], [], []>} : vector<8x128xbf16>, vector<128x384xbf16>, vector<8x384xf32> -> vector<8x384xf32>
    %371 = vector.extract_strided_slice %368 {offsets = [0, 0], sizes = [8, 256], strides = [1, 1]} : vector<8x384xf32> to vector<8x256xf32>
    %372 = vector.extract_strided_slice %370 {offsets = [0, 0], sizes = [8, 256], strides = [1, 1]} : vector<8x384xf32> to vector<8x256xf32>
    %373 = arith.addf %371, %372 : vector<8x256xf32>
    %374 = arith.negf %373 : vector<8x256xf32>
    %375 = math.exp %374 : vector<8x256xf32>
    %cst_65 = arith.constant 1.000000e+00 : f32
    %376 = vector.broadcast %cst_65 : f32 to vector<8x256xf32>
    %377 = arith.addf %376, %375 : vector<8x256xf32>
    %378 = arith.divf %376, %377 : vector<8x256xf32>
    %379 = vector.extract_strided_slice %378 {offsets = [0, 0], sizes = [8, 128], strides = [1, 1]} : vector<8x256xf32> to vector<8x128xf32>
    %380 = vector.extract_strided_slice %378 {offsets = [0, 128], sizes = [8, 128], strides = [1, 1]} : vector<8x256xf32> to vector<8x128xf32>
    %381 = vector.extract_strided_slice %368 {offsets = [0, 256], sizes = [8, 128], strides = [1, 1]} : vector<8x384xf32> to vector<8x128xf32>
    %382 = vector.extract_strided_slice %370 {offsets = [0, 256], sizes = [8, 128], strides = [1, 1]} : vector<8x384xf32> to vector<8x128xf32>
    %383 = arith.addf %382, %8 : vector<8x128xf32>
    %384 = arith.mulf %379, %383 : vector<8x128xf32>
    %385 = arith.addf %381, %384 : vector<8x128xf32>
    %386 = math.tanh %385 : vector<8x128xf32>
    %387 = arith.subf %366, %386 : vector<8x128xf32>
    %388 = arith.mulf %380, %387 : vector<8x128xf32>
    %389 = arith.addf %386, %388 : vector<8x128xf32>
    %c16_i32_66 = arith.constant 16 : i32
    %390 = arith.muli %arg1, %c16_i32_66 : i32
    %c13_i32 = arith.constant 13 : i32
    %391 = arith.addi %390, %c13_i32 : i32
    %c20_i32_67 = arith.constant 20 : i32
    %392 = arith.cmpi slt, %391, %c20_i32_67 : i32
    %393 = arith.select %392, %389, %366 : vector<8x128xf32>
    %394 = vector.extract_strided_slice %14 {offsets = [14, 0, 0], sizes = [1, 8, 384], strides = [1, 1, 1]} : vector<16x8x384xf32> to vector<1x8x384xf32>
    %395 = vector.shape_cast %394 : vector<1x8x384xf32> to vector<8x384xf32>
    %396 = arith.truncf %393 : vector<8x128xf32> to vector<8x128xbf16>
    %cst_68 = arith.constant dense<0.000000e+00> : vector<8x384xf32>
    %397 = tpu.matmul %396, %4, %cst_68 {dimension_numbers = #tpu.dot_dimension_numbers<[1], [0], [0], [1], [0, 0, 1, 1], [], []>} : vector<8x128xbf16>, vector<128x384xbf16>, vector<8x384xf32> -> vector<8x384xf32>
    %398 = vector.extract_strided_slice %395 {offsets = [0, 0], sizes = [8, 256], strides = [1, 1]} : vector<8x384xf32> to vector<8x256xf32>
    %399 = vector.extract_strided_slice %397 {offsets = [0, 0], sizes = [8, 256], strides = [1, 1]} : vector<8x384xf32> to vector<8x256xf32>
    %400 = arith.addf %398, %399 : vector<8x256xf32>
    %401 = arith.negf %400 : vector<8x256xf32>
    %402 = math.exp %401 : vector<8x256xf32>
    %cst_69 = arith.constant 1.000000e+00 : f32
    %403 = vector.broadcast %cst_69 : f32 to vector<8x256xf32>
    %404 = arith.addf %403, %402 : vector<8x256xf32>
    %405 = arith.divf %403, %404 : vector<8x256xf32>
    %406 = vector.extract_strided_slice %405 {offsets = [0, 0], sizes = [8, 128], strides = [1, 1]} : vector<8x256xf32> to vector<8x128xf32>
    %407 = vector.extract_strided_slice %405 {offsets = [0, 128], sizes = [8, 128], strides = [1, 1]} : vector<8x256xf32> to vector<8x128xf32>
    %408 = vector.extract_strided_slice %395 {offsets = [0, 256], sizes = [8, 128], strides = [1, 1]} : vector<8x384xf32> to vector<8x128xf32>
    %409 = vector.extract_strided_slice %397 {offsets = [0, 256], sizes = [8, 128], strides = [1, 1]} : vector<8x384xf32> to vector<8x128xf32>
    %410 = arith.addf %409, %8 : vector<8x128xf32>
    %411 = arith.mulf %406, %410 : vector<8x128xf32>
    %412 = arith.addf %408, %411 : vector<8x128xf32>
    %413 = math.tanh %412 : vector<8x128xf32>
    %414 = arith.subf %393, %413 : vector<8x128xf32>
    %415 = arith.mulf %407, %414 : vector<8x128xf32>
    %416 = arith.addf %413, %415 : vector<8x128xf32>
    %c16_i32_70 = arith.constant 16 : i32
    %417 = arith.muli %arg1, %c16_i32_70 : i32
    %c14_i32 = arith.constant 14 : i32
    %418 = arith.addi %417, %c14_i32 : i32
    %c20_i32_71 = arith.constant 20 : i32
    %419 = arith.cmpi slt, %418, %c20_i32_71 : i32
    %420 = arith.select %419, %416, %393 : vector<8x128xf32>
    %421 = vector.extract_strided_slice %14 {offsets = [15, 0, 0], sizes = [1, 8, 384], strides = [1, 1, 1]} : vector<16x8x384xf32> to vector<1x8x384xf32>
    %422 = vector.shape_cast %421 : vector<1x8x384xf32> to vector<8x384xf32>
    %423 = arith.truncf %420 : vector<8x128xf32> to vector<8x128xbf16>
    %cst_72 = arith.constant dense<0.000000e+00> : vector<8x384xf32>
    %424 = tpu.matmul %423, %4, %cst_72 {dimension_numbers = #tpu.dot_dimension_numbers<[1], [0], [0], [1], [0, 0, 1, 1], [], []>} : vector<8x128xbf16>, vector<128x384xbf16>, vector<8x384xf32> -> vector<8x384xf32>
    %425 = vector.extract_strided_slice %422 {offsets = [0, 0], sizes = [8, 256], strides = [1, 1]} : vector<8x384xf32> to vector<8x256xf32>
    %426 = vector.extract_strided_slice %424 {offsets = [0, 0], sizes = [8, 256], strides = [1, 1]} : vector<8x384xf32> to vector<8x256xf32>
    %427 = arith.addf %425, %426 : vector<8x256xf32>
    %428 = arith.negf %427 : vector<8x256xf32>
    %429 = math.exp %428 : vector<8x256xf32>
    %cst_73 = arith.constant 1.000000e+00 : f32
    %430 = vector.broadcast %cst_73 : f32 to vector<8x256xf32>
    %431 = arith.addf %430, %429 : vector<8x256xf32>
    %432 = arith.divf %430, %431 : vector<8x256xf32>
    %433 = vector.extract_strided_slice %432 {offsets = [0, 0], sizes = [8, 128], strides = [1, 1]} : vector<8x256xf32> to vector<8x128xf32>
    %434 = vector.extract_strided_slice %432 {offsets = [0, 128], sizes = [8, 128], strides = [1, 1]} : vector<8x256xf32> to vector<8x128xf32>
    %435 = vector.extract_strided_slice %422 {offsets = [0, 256], sizes = [8, 128], strides = [1, 1]} : vector<8x384xf32> to vector<8x128xf32>
    %436 = vector.extract_strided_slice %424 {offsets = [0, 256], sizes = [8, 128], strides = [1, 1]} : vector<8x384xf32> to vector<8x128xf32>
    %437 = arith.addf %436, %8 : vector<8x128xf32>
    %438 = arith.mulf %433, %437 : vector<8x128xf32>
    %439 = arith.addf %435, %438 : vector<8x128xf32>
    %440 = math.tanh %439 : vector<8x128xf32>
    %441 = arith.subf %420, %440 : vector<8x128xf32>
    %442 = arith.mulf %434, %441 : vector<8x128xf32>
    %443 = arith.addf %440, %442 : vector<8x128xf32>
    %c16_i32_74 = arith.constant 16 : i32
    %444 = arith.muli %arg1, %c16_i32_74 : i32
    %c15_i32 = arith.constant 15 : i32
    %445 = arith.addi %444, %c15_i32 : i32
    %c20_i32_75 = arith.constant 20 : i32
    %446 = arith.cmpi slt, %445, %c20_i32_75 : i32
    %447 = arith.select %446, %443, %420 : vector<8x128xf32>
    %c0_76 = arith.constant 0 : index
    %c0_77 = arith.constant 0 : index
    %448 = vector.load %arg7[%c0_76, %c0_77] : memref<8x128xf32, #tpu.memory_space<vmem>>, vector<8x128xf32>
    tpu.vector_store %arg7[%c0_76, %c0_77], %447 {strides = array<i32>} : memref<8x128xf32, #tpu.memory_space<vmem>>, vector<8x128xf32>,
    return
  }
  func.func @transform_0(%arg0: i32, %arg1: i32) -> (i32, i32, i32) {
    %c0_i32 = arith.constant 0 : i32
    %c0_i32_0 = arith.constant 0 : i32
    return %arg1, %arg0, %c0_i32 : i32, i32, i32
  }
  func.func @transform_1(%arg0: i32, %arg1: i32) -> (i32, i32) {
    %c0_i32 = arith.constant 0 : i32
    %c0_i32_0 = arith.constant 0 : i32
    %c0_i32_1 = arith.constant 0 : i32
    return %c0_i32, %c0_i32_0 : i32, i32
  }
  func.func @transform_2(%arg0: i32, %arg1: i32) -> (i32, i32) {
    %c0_i32 = arith.constant 0 : i32
    %c0_i32_0 = arith.constant 0 : i32
    %c0_i32_1 = arith.constant 0 : i32
    return %c0_i32, %c0_i32_0 : i32, i32
  }
  func.func @transform_3(%arg0: i32, %arg1: i32) -> (i32, i32) {
    %c0_i32 = arith.constant 0 : i32
    %c0_i32_0 = arith.constant 0 : i32
    %c0_i32_1 = arith.constant 0 : i32
    return %c0_i32, %c0_i32_0 : i32, i32
  }
  func.func @transform_4(%arg0: i32, %arg1: i32) -> (i32, i32) {
    %c0_i32 = arith.constant 0 : i32
    %c0_i32_0 = arith.constant 0 : i32
    %c0_i32_1 = arith.constant 0 : i32
    return %c0_i32, %c0_i32_0 : i32, i32
  }
  func.func @transform_5(%arg0: i32, %arg1: i32) -> (i32, i32) {
    %c0_i32 = arith.constant 0 : i32
    %c0_i32_0 = arith.constant 0 : i32
    return %arg0, %c0_i32 : i32, i32
  }
}

</mosaic_0001>

<llo_original>
// kernel: encoder_forward.1
$region0: #{encoder_forward.1}
  #allocation0 [shape = 'u32[]', space=smem, size = 0x4, offset = 0x4, fixed_abs, tag = 'smem constant byte address 0x4 - core index']
  #allocation1 [shape = 'u32[72,128]{1,0:T(1,128)}', space=vmem, size = 0x9000, scoped, tag = 'internal scratch']
  %s0 = inlined_call_operand.vmem [shape: bf16[32,8,64], index: 0, kind: input, shape index: {}]
  %s1 = inlined_call_operand.vmem [shape: bf16[64,384], index: 1, kind: input, shape index: {}]
  %s2 = inlined_call_operand.vmem [shape: f32[1,384], index: 2, kind: input, shape index: {}]
  %s3 = inlined_call_operand.vmem [shape: f32[1,128], index: 3, kind: input, shape index: {}]
  %s4 = inlined_call_operand.vmem [shape: bf16[128,384], index: 4, kind: input, shape index: {}]
  %s5 = inlined_call_operand.vmem [shape: f32[8,128], index: 5, kind: output, shape index: {}]
  %s6 = sld [smem:[#allocation0]]
  $region57: #{encoder_forward.1} parent=0
    _
  %s8 = ssub.s32 1, %s6
  %s9 = scalar_select 0, %s8, %s6
  loop: start=0, step=1, limit=4
  $region2: #{encoder_forward.1} parent=0 // loop_pre_header
    _
  $region3: #{encoder_forward.1} parent=0 // loop_header
    %s11 = sphi 0, %s15
    %p12 = scmp.ge.s32.totalorder %s11, 4
    %s18 = sphi 0, %s30
    %s19 = sphi 0, %s26
    %s20 = sphi 0, %s18
    %s21 = sphi 0, %s19
    %s22 = sphi 0, %s20
    %s23 = sphi 0, %s21
    %s35 = sphi 0, %s37
    %s38 = sphi 0, %s35
    %s39 = sphi 0, %s38
    %s55 = sphi 0, %s39
    %s59 = sphi 0, %s59
    %s61 = sphi 0, %s59
    %s62 = sphi 0, %s61
    %s76 = sphi 0, %s62
    %s80 = sphi 0, %s80
    %s82 = sphi 0, %s80
    %s83 = sphi 0, %s82
    %s97 = sphi 0, %s83
    %s101 = sphi 0, %s101
    %s103 = sphi 0, %s101
    %s104 = sphi 0, %s103
    %s118 = sphi 0, %s104
    %s122 = sphi 0, %s122
    %s124 = sphi 0, %s122
    %s125 = sphi 0, %s124
    %s139 = sphi 0, %s125
    %s145 = sphi 0, %s147
    %s148 = sphi 0, %s145
    %s149 = sphi 0, %s148
    %s165 = sphi 0, %s149
  $region4: #{encoder_forward.1} parent=0 // loop_header_branch
    %14 = sbr.rel (%p12) target = $region8
  $region5: #{encoder_forward.1} parent=0 // loop_body
    %s16 = ssub.s32 %s11, 1
    %s17 = ssub.s32 %s11, 2
    %s24 = sadd.s32 1, %s19
    %p25 = scmp.ge.s32.totalorder %s24, 2
    %s26 = scalar_select %p25, 0, %s24
    %s27 = sadd.s32 1, %s18
    %s28 = scalar_select %p25, %s27, %s18
    %p29 = scmp.ge.s32.totalorder %s28, 1
    %s30 = scalar_select %p29, 0, %s28
    %s31 = ssub.s32 %s19, %s26
    %s32 = ssub.s32 %s18, %s30
    %s33 = sor.u32 %s31, %s32
    %p34 = scmp.eq.s32.totalorder %s33, 0
    %s36 = sadd.s32 %s35, 1
    %s37 = scalar_select %p34, %s35, %s36
    %p40 = pneg %p34
    %p41 = scmp.eq.s32.totalorder %s11, 1
    %p42 = por %p40, %p41
    %p43 = scmp.ne.s32.totalorder %s35, %s38
    %p44 = scmp.eq.s32.totalorder %s11, 0
    %p45 = por %p43, %p44
    %p46 = scmp.ne.s32.totalorder %s35, %s38
    %p47 = scmp.eq.s32.totalorder %s16, 1
    %p48 = por %p46, %p47
    %p49 = scmp.ne.s32.totalorder %s38, %s39
    %p50 = scmp.eq.s32.totalorder %s16, 0
    %p51 = por %p49, %p50
    %p52 = scmp.ne.s32.totalorder %s38, %s39
    %p53 = scmp.eq.s32.totalorder %s17, 1
    %p54 = por %p52, %p53
    %p56 = scmp.ne.s32.totalorder %s39, %s55
    %p57 = scmp.eq.s32.totalorder %s17, 0
    %p58 = por %p56, %p57
    %s60 = sadd.s32 %s59, 1
    %p63 = scmp.eq.s32.totalorder %s11, 1
    %p64 = scmp.ne.s32.totalorder %s59, %s61
    %p65 = scmp.eq.s32.totalorder %s11, 0
    %p66 = por %p64, %p65
    %p67 = scmp.ne.s32.totalorder %s59, %s61
    %p68 = scmp.eq.s32.totalorder %s16, 1
    %p69 = por %p67, %p68
    %p70 = scmp.ne.s32.totalorder %s61, %s62
    %p71 = scmp.eq.s32.totalorder %s16, 0
    %p72 = por %p70, %p71
    %p73 = scmp.ne.s32.totalorder %s61, %s62
    %p74 = scmp.eq.s32.totalorder %s17, 1
    %p75 = por %p73, %p74
    %p77 = scmp.ne.s32.totalorder %s62, %s76
    %p78 = scmp.eq.s32.totalorder %s17, 0
    %p79 = por %p77, %p78
    %s81 = sadd.s32 %s80, 1
    %p84 = scmp.eq.s32.totalorder %s11, 1
    %p85 = scmp.ne.s32.totalorder %s80, %s82
    %p86 = scmp.eq.s32.totalorder %s11, 0
    %p87 = por %p85, %p86
    %p88 = scmp.ne.s32.totalorder %s80, %s82
    %p89 = scmp.eq.s32.totalorder %s16, 1
    %p90 = por %p88, %p89
    %p91 = scmp.ne.s32.totalorder %s82, %s83
    %p92 = scmp.eq.s32.totalorder %s16, 0
    %p93 = por %p91, %p92
    %p94 = scmp.ne.s32.totalorder %s82, %s83
    %p95 = scmp.eq.s32.totalorder %s17, 1
    %p96 = por %p94, %p95
    %p98 = scmp.ne.s32.totalorder %s83, %s97
    %p99 = scmp.eq.s32.totalorder %s17, 0
    %p100 = por %p98, %p99
    %s102 = sadd.s32 %s101, 1
    %p105 = scmp.eq.s32.totalorder %s11, 1
    %p106 = scmp.ne.s32.totalorder %s101, %s103
    %p107 = scmp.eq.s32.totalorder %s11, 0
    %p108 = por %p106, %p107
    %p109 = scmp.ne.s32.totalorder %s101, %s103
    %p110 = scmp.eq.s32.totalorder %s16, 1
    %p111 = por %p109, %p110
    %p112 = scmp.ne.s32.totalorder %s103, %s104
    %p113 = scmp.eq.s32.totalorder %s16, 0
    %p114 = por %p112, %p113
    %p115 = scmp.ne.s32.totalorder %s103, %s104
    %p116 = scmp.eq.s32.totalorder %s17, 1
    %p117 = por %p115, %p116
    %p119 = scmp.ne.s32.totalorder %s104, %s118
    %p120 = scmp.eq.s32.totalorder %s17, 0
    %p121 = por %p119, %p120
    %s123 = sadd.s32 %s122, 1
    %p126 = scmp.eq.s32.totalorder %s11, 1
    %p127 = scmp.ne.s32.totalorder %s122, %s124
    %p128 = scmp.eq.s32.totalorder %s11, 0
    %p129 = por %p127, %p128
    %p130 = scmp.ne.s32.totalorder %s122, %s124
    %p131 = scmp.eq.s32.totalorder %s16, 1
    %p132 = por %p130, %p131
    %p133 = scmp.ne.s32.totalorder %s124, %s125
    %p134 = scmp.eq.s32.totalorder %s16, 0
    %p135 = por %p133, %p134
    %p136 = scmp.ne.s32.totalorder %s124, %s125
    %p137 = scmp.eq.s32.totalorder %s17, 1
    %p138 = por %p136, %p137
    %p140 = scmp.ne.s32.totalorder %s125, %s139
    %p141 = scmp.eq.s32.totalorder %s17, 0
    %p142 = por %p140, %p141
    %s143 = ssub.s32 %s18, %s30
    %p144 = scmp.eq.s32.totalorder %s143, 0
    %s146 = sadd.s32 %s145, 1
    %s147 = scalar_select %p144, %s145, %s146
    %p150 = pneg %p144
    %p151 = scmp.eq.s32.totalorder %s11, 1
    %p152 = por %p150, %p151
    %p153 = scmp.ne.s32.totalorder %s145, %s148
    %p154 = scmp.eq.s32.totalorder %s11, 0
    %p155 = por %p153, %p154
    %p156 = scmp.ne.s32.totalorder %s145, %s148
    %p157 = scmp.eq.s32.totalorder %s16, 1
    %p158 = por %p156, %p157
    %p159 = scmp.ne.s32.totalorder %s148, %s149
    %p160 = scmp.eq.s32.totalorder %s16, 0
    %p161 = por %p159, %p160
    %p162 = scmp.ne.s32.totalorder %s148, %s149
    %p163 = scmp.eq.s32.totalorder %s17, 1
    %p164 = por %p162, %p163
    %p166 = scmp.ne.s32.totalorder %s149, %s165
    %p167 = scmp.eq.s32.totalorder %s17, 0
    %p168 = por %p166, %p167
    %p169 = scmp.le.s32.totalorder 1, %s11
    %p170 = scmp.lt.s32.totalorder %s11, 3
    %p171 = pnand %p169, %p170
    %p172 = pneg %p171
    // Predicated region
    $region9: #{encoder_forward.1} parent=5 // pred_check
      _
    $region10: #{encoder_forward.1} parent=5 // pred_check_branch
      %174 = sbr.rel (%p171) target = $region12
    $region11: #{encoder_forward.1} parent=5 // pred_region
      %s175 = ssub.s32 %s11, 1
      // Predicated region
      $region13: #{encoder_forward.1} parent=11 // pred_check
        %p176 = pneg %p72
      $region14: #{encoder_forward.1} parent=11 // pred_check_branch
        %178 = sbr.rel (%p176) target = $region16
      $region15: #{encoder_forward.1} parent=11 // pred_region
        _
      $region16: #{encoder_forward.1} parent=11 // pred_fallthru
        _
      // Predicated region
      $region17: #{encoder_forward.1} parent=11 // pred_check
        %p179 = pneg %p93
      $region18: #{encoder_forward.1} parent=11 // pred_check_branch
        %181 = sbr.rel (%p179) target = $region20
      $region19: #{encoder_forward.1} parent=11 // pred_region
        _
      $region20: #{encoder_forward.1} parent=11 // pred_fallthru
        _
      // Predicated region
      $region21: #{encoder_forward.1} parent=11 // pred_check
        %p182 = pneg %p114
      $region22: #{encoder_forward.1} parent=11 // pred_check_branch
        %184 = sbr.rel (%p182) target = $region24
      $region23: #{encoder_forward.1} parent=11 // pred_region
        _
      $region24: #{encoder_forward.1} parent=11 // pred_fallthru
        _
      // Predicated region
      $region25: #{encoder_forward.1} parent=11 // pred_check
        %p185 = pneg %p135
      $region26: #{encoder_forward.1} parent=11 // pred_check_branch
        %187 = sbr.rel (%p185) target = $region28
      $region27: #{encoder_forward.1} parent=11 // pred_region
        _
      $region28: #{encoder_forward.1} parent=11 // pred_fallthru
        _
    $region12: #{encoder_forward.1} parent=5 // pred_fallthru
      _
    %p188 = scmp.lt.s32.totalorder %s11, 2
    // Predicated region
    $region29: #{encoder_forward.1} parent=5 // pred_check
      %p189 = pneg %p188
    $region30: #{encoder_forward.1} parent=5 // pred_check_branch
      %191 = sbr.rel (%p189) target = $region32
    $region31: #{encoder_forward.1} parent=5 // pred_region
      // Predicated region
      $region33: #{encoder_forward.1} parent=31 // pred_check
        %p192 = pneg %p45
      $region34: #{encoder_forward.1} parent=31 // pred_check_branch
        %194 = sbr.rel (%p192) target = $region36
      $region35: #{encoder_forward.1} parent=31 // pred_region
        %s195 = smul.u32 16, %s19
        %p196 = scmp.lt.s32.totalorder %s195, 31
        %s197 = scalar_select %p196, %s195, 31
        %p198 = scmp.lt.s32.totalorder %s18, 0
        %s199 = scalar_select %p198, %s18, 0
        %s200 = sadd.s32 %s199, %s197
        %s201 = smul.addr %s200, 4
        %s202 = scalar_lea.vmem %s0, %s201
        %s203 = smul.u32 16, %s19
      $region36: #{encoder_forward.1} parent=31 // pred_fallthru
        _
    $region32: #{encoder_forward.1} parent=5 // pred_fallthru
      _
    %p204 = scmp.le.s32.totalorder 1, %s11
    %p205 = scmp.lt.s32.totalorder %s11, 3
    %p206 = pnand %p204, %p205
    %p207 = pneg %p206
    // Predicated region
    $region37: #{encoder_forward.1} parent=5 // pred_check
      _
    $region38: #{encoder_forward.1} parent=5 // pred_check_branch
      %209 = sbr.rel (%p206) target = $region40
    $region39: #{encoder_forward.1} parent=5 // pred_region
      %s210 = ssub.s32 %s11, 1
      %s211 = smul.u32 16, %s21
      %p212 = scmp.lt.s32.totalorder %s211, 31
      %s213 = scalar_select %p212, %s211, 31
      %p214 = scmp.lt.s32.totalorder %s20, 0
      %s215 = scalar_select %p214, %s20, 0
      %s216 = sadd.s32 %s215, %s213
      %s217 = smul.addr %s216, 4
      %s218 = scalar_lea.vmem %s0, %s217
      %p219 = pneg %p51
      %p220 = pneg %p48
      %p221 = pneg %p72
      %p222 = pneg %p69
      %p223 = pneg %p93
      %p224 = pneg %p90
      %p225 = pneg %p114
      %p226 = pneg %p111
      %p227 = pneg %p135
      %p228 = pneg %p132
      %p229 = pneg %p161
      %p230 = pneg %p158
      %p231 = scmp.lt.s32.totalorder %s20, 0
      %s232 = scalar_select %p231, %s20, 0
      %s233 = smul.addr %s232, 8
      %s234 = scalar_lea.vmem %s5, %s233
      %s235 = smul.u32 16, %s21
      %p236 = scmp.lt.s32.totalorder %s235, 31
      %s237 = scalar_select %p236, %s235, 31
      %p238 = scmp.lt.s32.totalorder %s20, 0
      %s239 = scalar_select %p238, %s20, 0
      %s240 = sadd.s32 %s239, %s237
      %s241 = smul.addr %s240, 4
      %s242 = scalar_lea.vmem %s0, %s241
      %s243 = smul.u32 16, %s21
      %p244 = scmp.lt.s32.totalorder %s20, 0
      %s245 = scalar_select %p244, %s20, 0
      %s246 = smul.addr %s245, 8
      %s247 = scalar_lea.vmem %s5, %s246
      %p249 = scmp.eq.s32.totalorder %s21, 0
      // Predicated region
      $region41: #{encoder_forward.1} parent=39 // pred_check
        %p250 = pneg %p249
      $region42: #{encoder_forward.1} parent=39 // pred_check_branch
        %252 = sbr.rel (%p250) target = $region44
      $region43: #{encoder_forward.1} parent=39 // pred_region
        %253 = vst [vmem:[%s247] sm:$0xff] 0.0
      $region44: #{encoder_forward.1} parent=39 // pred_fallthru
        _
      %v254 = vld [vmem:[%s1] sm:$0xff]
      %v255 = vld [vmem:[%s1 + $0x8] sm:$0xf]
      %v256 = vld [vmem:[%s1 + $0xc] sm:$0xff]
      %v257 = vld [vmem:[%s1 + $0x14] sm:$0xf]
      %v258 = vld [vmem:[%s1 + $0x18] sm:$0xff]
      %v259 = vld [vmem:[%s1 + $0x20] sm:$0xf]
      %v260 = vld [vmem:[%s1 + $0x24] sm:$0xff]
      %v261 = vld [vmem:[%s1 + $0x2c] sm:$0xf]
      %v262 = vld [vmem:[%s1 + $0x30] sm:$0xff]
      %v263 = vld [vmem:[%s1 + $0x38] sm:$0xf]
      %v264 = vld [vmem:[%s1 + $0x3c] sm:$0xff]
      %v265 = vld [vmem:[%s1 + $0x44] sm:$0xf]
      %v266 = vld [vmem:[%s1 + $0x48] sm:$0xff]
      %v267 = vld [vmem:[%s1 + $0x50] sm:$0xf]
      %v268 = vld [vmem:[%s1 + $0x54] sm:$0xff]
      %v269 = vld [vmem:[%s1 + $0x5c] sm:$0xf]
      %v270 = vld [vmem:[%s4] sm:$0xff]
      %v271 = vld [vmem:[%s4 + $0x8] sm:$0xf]
      %v272 = vld [vmem:[%s4 + $0xc] sm:$0xff]
      %v273 = vld [vmem:[%s4 + $0x14] sm:$0xf]
      %v274 = vld [vmem:[%s4 + $0x18] sm:$0xff]
      %v275 = vld [vmem:[%s4 + $0x20] sm:$0xf]
      %v276 = vld [vmem:[%s4 + $0x24] sm:$0xff]
      %v277 = vld [vmem:[%s4 + $0x2c] sm:$0xf]
      %v278 = vld [vmem:[%s4 + $0x30] sm:$0xff]
      %v279 = vld [vmem:[%s4 + $0x38] sm:$0xf]
      %v280 = vld [vmem:[%s4 + $0x3c] sm:$0xff]
      %v281 = vld [vmem:[%s4 + $0x44] sm:$0xf]
      %v282 = vld [vmem:[%s4 + $0x48] sm:$0xff]
      %v283 = vld [vmem:[%s4 + $0x50] sm:$0xf]
      %v284 = vld [vmem:[%s4 + $0x54] sm:$0xff]
      %v285 = vld [vmem:[%s4 + $0x5c] sm:$0xf]
      %v286 = vld [vmem:[%s4 + $0x60] sm:$0xff]
      %v287 = vld [vmem:[%s4 + $0x68] sm:$0xf]
      %v288 = vld [vmem:[%s4 + $0x6c] sm:$0xff]
      %v289 = vld [vmem:[%s4 + $0x74] sm:$0xf]
      %v290 = vld [vmem:[%s4 + $0x78] sm:$0xff]
      %v291 = vld [vmem:[%s4 + $0x80] sm:$0xf]
      %v292 = vld [vmem:[%s4 + $0x84] sm:$0xff]
      %v293 = vld [vmem:[%s4 + $0x8c] sm:$0xf]
      %v294 = vld [vmem:[%s4 + $0x90] sm:$0xff]
      %v295 = vld [vmem:[%s4 + $0x98] sm:$0xf]
      %v296 = vld [vmem:[%s4 + $0x9c] sm:$0xff]
      %v297 = vld [vmem:[%s4 + $0xa4] sm:$0xf]
      %v298 = vld [vmem:[%s4 + $0xa8] sm:$0xff]
      %v299 = vld [vmem:[%s4 + $0xb0] sm:$0xf]
      %v300 = vld [vmem:[%s4 + $0xb4] sm:$0xff]
      %v301 = vld [vmem:[%s4 + $0xbc] sm:$0xf]
      %v302 = vld [vmem:[%s2] sm:$0x7]
      %v303 = vld [vmem:[%s3] sm:$0x1]
      %v305 = vperm.slane %v303, 0
      %v307 = vld [vmem:[%s242] sm:$0xf]
      %v308 = vld [vmem:[%s242 + $0x4] sm:$0xf]
      %v309 = vld [vmem:[%s242 + $0x8] sm:$0xf]
      %v310 = vld [vmem:[%s242 + $0xc] sm:$0xf]
      %v311 = vld [vmem:[%s242 + $0x10] sm:$0xf]
      %v312 = vld [vmem:[%s242 + $0x14] sm:$0xf]
      %v313 = vld [vmem:[%s242 + $0x18] sm:$0xf]
      %v314 = vld [vmem:[%s242 + $0x1c] sm:$0xf]
      %v315 = vld [vmem:[%s242 + $0x20] sm:$0xf]
      %v316 = vld [vmem:[%s242 + $0x24] sm:$0xf]
      %v317 = vld [vmem:[%s242 + $0x28] sm:$0xf]
      %v318 = vld [vmem:[%s242 + $0x2c] sm:$0xf]
      %v319 = vld [vmem:[%s242 + $0x30] sm:$0xf]
      %v320 = vld [vmem:[%s242 + $0x34] sm:$0xf]
      %v321 = vld [vmem:[%s242 + $0x38] sm:$0xf]
      %v322 = vld [vmem:[%s242 + $0x3c] sm:$0xf]
      %v324 = vperm.slane %v302, 0
      %v325 = vperm.slane %v302, 1
      %v326 = vperm.slane %v302, 2
      %v346 = vunpack.c.l.b16 %v307
      %v347 = vunpack.c.l.b16 %v308
      %v348 = vunpack.c.l.b16 %v309
      %v349 = vunpack.c.l.b16 %v310
      %v350 = vunpack.c.l.b16 %v311
      %v351 = vunpack.c.l.b16 %v312
      %v352 = vunpack.c.l.b16 %v313
      %v353 = vunpack.c.l.b16 %v314
      %v354 = vunpack.c.l.b16 %v315
      %v355 = vunpack.c.l.b16 %v316
      %v356 = vunpack.c.l.b16 %v317
      %v357 = vunpack.c.l.b16 %v318
      %v358 = vunpack.c.l.b16 %v319
      %v359 = vunpack.c.l.b16 %v320
      %v360 = vunpack.c.l.b16 %v321
      %v361 = vunpack.c.l.b16 %v322
      %v362 = vpack.c.b16 %v347, %v346
      %v363 = vpack.c.b16 %v349, %v348
      %v364 = vpack.c.b16 %v351, %v350
      %v365 = vpack.c.b16 %v353, %v352
      %v366 = vpack.c.b16 %v355, %v354
      %v367 = vpack.c.b16 %v357, %v356
      %v368 = vpack.c.b16 %v359, %v358
      %v369 = vpack.c.b16 %v361, %v360
      %v386 = vunpack.c.l.b16 %v254
      %v387 = vunpack.c.h.b16 %v254
      %v388 = vunpack.c.l.b16 %v255
      %v389 = vunpack.c.l.b16 %v256
      %v390 = vunpack.c.h.b16 %v256
      %v391 = vunpack.c.l.b16 %v257
      %v392 = vunpack.c.l.b16 %v258
      %v393 = vunpack.c.h.b16 %v258
      %v394 = vunpack.c.l.b16 %v259
      %v395 = vunpack.c.l.b16 %v260
      %v396 = vunpack.c.h.b16 %v260
      %v397 = vunpack.c.l.b16 %v261
      %v398 = vunpack.c.l.b16 %v262
      %v399 = vunpack.c.h.b16 %v262
      %v400 = vunpack.c.l.b16 %v263
      %v401 = vunpack.c.l.b16 %v264
      %v402 = vunpack.c.h.b16 %v264
      %v403 = vunpack.c.l.b16 %v265
      %v404 = vunpack.c.l.b16 %v266
      %v405 = vunpack.c.h.b16 %v266
      %v406 = vunpack.c.l.b16 %v267
      %v407 = vunpack.c.l.b16 %v268
      %v408 = vunpack.c.h.b16 %v268
      %v409 = vunpack.c.l.b16 %v269
      %v410 = vpack.c.b16 %v389, %v386
      %v411 = vpack.c.b16 %v390, %v387
      %v412 = vpack.c.b16 %v391, %v388
      %v413 = vpack.c.b16 %v395, %v392
      %v414 = vpack.c.b16 %v396, %v393
      %v415 = vpack.c.b16 %v397, %v394
      %v416 = vpack.c.b16 %v401, %v398
      %v417 = vpack.c.b16 %v402, %v399
      %v418 = vpack.c.b16 %v403, %v400
      %v419 = vpack.c.b16 %v407, %v404
      %v420 = vpack.c.b16 %v408, %v405
      %v421 = vpack.c.b16 %v409, %v406
      %vm434 = vcmask 523264
      %v436 = vsel %vm434, %v362, 0
      %v439 = vsel %vm434, %v363, 0
      %v442 = vsel %vm434, %v364, 0
      %v445 = vsel %vm434, %v365, 0
      %v448 = vsel %vm434, %v366, 0
      %v451 = vsel %vm434, %v367, 0
      %v454 = vsel %vm434, %v368, 0
      %v457 = vsel %vm434, %v369, 0
      %459 = vmatpush.bf16.msra.mxu0 0
      %460 = vmatpush.bf16.msra.mxu0 0
      %461 = vmatpush.bf16.msra.mxu0 0
      %462 = vmatpush.bf16.msra.mxu0 0
      %463 = vmatpush.bf16.msra.mxu0 %v419
      %464 = vmatpush.bf16.msra.mxu0 %v416
      %465 = vmatpush.bf16.msra.mxu0 %v413
      %466 = vmatpush.bf16.msra.mxu0 %v410
      %467 = vmatmul.bf16.gmra.mxu0 %v436
      %v468 = vpop.f32.mrf.mxu0
      %v469 = vadd.f32 %v324, %v468
      %v470 = vpop.f32.mrf.mxu0
      %v471 = vadd.f32 %v324, %v470
      %472 = vmatmul.bf16.gmra.mxu0 %v439
      %v473 = vpop.f32.mrf.mxu0
      %v474 = vadd.f32 %v324, %v473
      %v475 = vpop.f32.mrf.mxu0
      %v476 = vadd.f32 %v324, %v475
      %477 = vmatmul.bf16.gmra.mxu0 %v442
      %v478 = vpop.f32.mrf.mxu0
      %v479 = vadd.f32 %v324, %v478
      %v480 = vpop.f32.mrf.mxu0
      %v481 = vadd.f32 %v324, %v480
      %482 = vmatmul.bf16.gmra.mxu0 %v445
      %v483 = vpop.f32.mrf.mxu0
      %v484 = vadd.f32 %v324, %v483
      %v485 = vpop.f32.mrf.mxu0
      %v486 = vadd.f32 %v324, %v485
      %487 = vmatmul.bf16.gmra.mxu0 %v448
      %v488 = vpop.f32.mrf.mxu0
      %v489 = vadd.f32 %v324, %v488
      %v490 = vpop.f32.mrf.mxu0
      %v491 = vadd.f32 %v324, %v490
      %492 = vmatmul.bf16.gmra.mxu0 %v451
      %v493 = vpop.f32.mrf.mxu0
      %v494 = vadd.f32 %v324, %v493
      %v495 = vpop.f32.mrf.mxu0
      %v496 = vadd.f32 %v324, %v495
      %497 = vmatmul.bf16.gmra.mxu0 %v454
      %v498 = vpop.f32.mrf.mxu0
      %v499 = vadd.f32 %v324, %v498
      %v500 = vpop.f32.mrf.mxu0
      %v501 = vadd.f32 %v324, %v500
      %502 = vmatmul.bf16.gmra.mxu0 %v457
      %v503 = vpop.f32.mrf.mxu0
      %v504 = vadd.f32 %v324, %v503
      %v505 = vpop.f32.mrf.mxu0
      %v506 = vadd.f32 %v324, %v505
      %507 = vdwg.mxu0
      %508 = vmatpush.bf16.msra.mxu0 0
      %509 = vmatpush.bf16.msra.mxu0 0
      %510 = vmatpush.bf16.msra.mxu0 0
      %511 = vmatpush.bf16.msra.mxu0 0
      %512 = vmatpush.bf16.msra.mxu0 %v420
      %513 = vmatpush.bf16.msra.mxu0 %v417
      %514 = vmatpush.bf16.msra.mxu0 %v414
      %515 = vmatpush.bf16.msra.mxu0 %v411
      %516 = vmatmul.bf16.gmra.mxu0 %v436
      %v517 = vpop.f32.mrf.mxu0
      %v518 = vadd.f32 %v325, %v517
      %v519 = vpop.f32.mrf.mxu0
      %v520 = vadd.f32 %v325, %v519
      %521 = vmatmul.bf16.gmra.mxu0 %v439
      %v522 = vpop.f32.mrf.mxu0
      %v523 = vadd.f32 %v325, %v522
      %v524 = vpop.f32.mrf.mxu0
      %v525 = vadd.f32 %v325, %v524
      %526 = vmatmul.bf16.gmra.mxu0 %v442
      %v527 = vpop.f32.mrf.mxu0
      %v528 = vadd.f32 %v325, %v527
      %v529 = vpop.f32.mrf.mxu0
      %v530 = vadd.f32 %v325, %v529
      %531 = vmatmul.bf16.gmra.mxu0 %v445
      %v532 = vpop.f32.mrf.mxu0
      %v533 = vadd.f32 %v325, %v532
      %v534 = vpop.f32.mrf.mxu0
      %v535 = vadd.f32 %v325, %v534
      %536 = vmatmul.bf16.gmra.mxu0 %v448
      %v537 = vpop.f32.mrf.mxu0
      %v538 = vadd.f32 %v325, %v537
      %v539 = vpop.f32.mrf.mxu0
      %v540 = vadd.f32 %v325, %v539
      %541 = vmatmul.bf16.gmra.mxu0 %v451
      %v542 = vpop.f32.mrf.mxu0
      %v543 = vadd.f32 %v325, %v542
      %v544 = vpop.f32.mrf.mxu0
      %v545 = vadd.f32 %v325, %v544
      %546 = vmatmul.bf16.gmra.mxu0 %v454
      %v547 = vpop.f32.mrf.mxu0
      %v548 = vadd.f32 %v325, %v547
      %v549 = vpop.f32.mrf.mxu0
      %v550 = vadd.f32 %v325, %v549
      %551 = vmatmul.bf16.gmra.mxu0 %v457
      %v552 = vpop.f32.mrf.mxu0
      %v553 = vadd.f32 %v325, %v552
      %v554 = vpop.f32.mrf.mxu0
      %v555 = vadd.f32 %v325, %v554
      %556 = vdwg.mxu0
      %557 = vmatpush.bf16.msra.mxu0 0
      %558 = vmatpush.bf16.msra.mxu0 0
      %559 = vmatpush.bf16.msra.mxu0 0
      %560 = vmatpush.bf16.msra.mxu0 0
      %561 = vmatpush.bf16.msra.mxu0 %v421
      %562 = vmatpush.bf16.msra.mxu0 %v418
      %563 = vmatpush.bf16.msra.mxu0 %v415
      %564 = vmatpush.bf16.msra.mxu0 %v412
      %565 = vmatmul.bf16.gmra.mxu0 %v436
      %v566 = vpop.f32.mrf.mxu0
      %v567 = vadd.f32 %v326, %v566
      %v568 = vpop.f32.mrf.mxu0
      %v569 = vadd.f32 %v326, %v568
      %570 = vmatmul.bf16.gmra.mxu0 %v439
      %v571 = vpop.f32.mrf.mxu0
      %v572 = vadd.f32 %v326, %v571
      %v573 = vpop.f32.mrf.mxu0
      %v574 = vadd.f32 %v326, %v573
      %575 = vmatmul.bf16.gmra.mxu0 %v442
      %v576 = vpop.f32.mrf.mxu0
      %v577 = vadd.f32 %v326, %v576
      %v578 = vpop.f32.mrf.mxu0
      %v579 = vadd.f32 %v326, %v578
      %580 = vmatmul.bf16.gmra.mxu0 %v445
      %v581 = vpop.f32.mrf.mxu0
      %v582 = vadd.f32 %v326, %v581
      %v583 = vpop.f32.mrf.mxu0
      %v584 = vadd.f32 %v326, %v583
      %585 = vmatmul.bf16.gmra.mxu0 %v448
      %v586 = vpop.f32.mrf.mxu0
      %v587 = vadd.f32 %v326, %v586
      %v588 = vpop.f32.mrf.mxu0
      %v589 = vadd.f32 %v326, %v588
      %590 = vmatmul.bf16.gmra.mxu0 %v451
      %v591 = vpop.f32.mrf.mxu0
      %v592 = vadd.f32 %v326, %v591
      %v593 = vpop.f32.mrf.mxu0
      %v594 = vadd.f32 %v326, %v593
      %595 = vmatmul.bf16.gmra.mxu0 %v454
      %v596 = vpop.f32.mrf.mxu0
      %v597 = vadd.f32 %v326, %v596
      %v598 = vpop.f32.mrf.mxu0
      %v599 = vadd.f32 %v326, %v598
      %600 = vmatmul.bf16.gmra.mxu0 %v457
      %v601 = vpop.f32.mrf.mxu0
      %v602 = vadd.f32 %v326, %v601
      %v603 = vpop.f32.mrf.mxu0
      %v604 = vadd.f32 %v326, %v603
      %605 = vdwg.mxu0
      %v606 = vld [vmem:[%s247] sm:$0xff]
      %v607 = vpack.c.bf16 %v606, %v606
      %v640 = vunpack.c.l.b16 %v270
      %v641 = vunpack.c.h.b16 %v270
      %v642 = vunpack.c.l.b16 %v271
      %v643 = vunpack.c.l.b16 %v272
      %v644 = vunpack.c.h.b16 %v272
      %v645 = vunpack.c.l.b16 %v273
      %v646 = vunpack.c.l.b16 %v274
      %v647 = vunpack.c.h.b16 %v274
      %v648 = vunpack.c.l.b16 %v275
      %v649 = vunpack.c.l.b16 %v276
      %v650 = vunpack.c.h.b16 %v276
      %v651 = vunpack.c.l.b16 %v277
      %v652 = vunpack.c.l.b16 %v278
      %v653 = vunpack.c.h.b16 %v278
      %v654 = vunpack.c.l.b16 %v279
      %v655 = vunpack.c.l.b16 %v280
      %v656 = vunpack.c.h.b16 %v280
      %v657 = vunpack.c.l.b16 %v281
      %v658 = vunpack.c.l.b16 %v282
      %v659 = vunpack.c.h.b16 %v282
      %v660 = vunpack.c.l.b16 %v283
      %v661 = vunpack.c.l.b16 %v284
      %v662 = vunpack.c.h.b16 %v284
      %v663 = vunpack.c.l.b16 %v285
      %v664 = vunpack.c.l.b16 %v286
      %v665 = vunpack.c.h.b16 %v286
      %v666 = vunpack.c.l.b16 %v287
      %v667 = vunpack.c.l.b16 %v288
      %v668 = vunpack.c.h.b16 %v288
      %v669 = vunpack.c.l.b16 %v289
      %v670 = vunpack.c.l.b16 %v290
      %v671 = vunpack.c.h.b16 %v290
      %v672 = vunpack.c.l.b16 %v291
      %v673 = vunpack.c.l.b16 %v292
      %v674 = vunpack.c.h.b16 %v292
      %v675 = vunpack.c.l.b16 %v293
      %v676 = vunpack.c.l.b16 %v294
      %v677 = vunpack.c.h.b16 %v294
      %v678 = vunpack.c.l.b16 %v295
      %v679 = vunpack.c.l.b16 %v296
      %v680 = vunpack.c.h.b16 %v296
      %v681 = vunpack.c.l.b16 %v297
      %v682 = vunpack.c.l.b16 %v298
      %v683 = vunpack.c.h.b16 %v298
      %v684 = vunpack.c.l.b16 %v299
      %v685 = vunpack.c.l.b16 %v300
      %v686 = vunpack.c.h.b16 %v300
      %v687 = vunpack.c.l.b16 %v301
      %v688 = vpack.c.b16 %v643, %v640
      %v689 = vpack.c.b16 %v644, %v641
      %v690 = vpack.c.b16 %v645, %v642
      %v691 = vpack.c.b16 %v649, %v646
      %v692 = vpack.c.b16 %v650, %v647
      %v693 = vpack.c.b16 %v651, %v648
      %v694 = vpack.c.b16 %v655, %v652
      %v695 = vpack.c.b16 %v656, %v653
      %v696 = vpack.c.b16 %v657, %v654
      %v697 = vpack.c.b16 %v661, %v658
      %v698 = vpack.c.b16 %v662, %v659
      %v699 = vpack.c.b16 %v663, %v660
      %v700 = vpack.c.b16 %v667, %v664
      %v701 = vpack.c.b16 %v668, %v665
      %v702 = vpack.c.b16 %v669, %v666
      %v703 = vpack.c.b16 %v673, %v670
      %v704 = vpack.c.b16 %v674, %v671
      %v705 = vpack.c.b16 %v675, %v672
      %v706 = vpack.c.b16 %v679, %v676
      %v707 = vpack.c.b16 %v680, %v677
      %v708 = vpack.c.b16 %v681, %v678
      %v709 = vpack.c.b16 %v685, %v682
      %v710 = vpack.c.b16 %v686, %v683
      %v711 = vpack.c.b16 %v687, %v684
      %736 = vmatpush.bf16.msra.mxu0 %v709
      %737 = vmatpush.bf16.msra.mxu0 %v706
      %738 = vmatpush.bf16.msra.mxu0 %v703
      %739 = vmatpush.bf16.msra.mxu0 %v700
      %740 = vmatpush.bf16.msra.mxu0 %v697
      %741 = vmatpush.bf16.msra.mxu0 %v694
      %742 = vmatpush.bf16.msra.mxu0 %v691
      %743 = vmatpush.bf16.msra.mxu0 %v688
      %744 = vmatmul.bf16.gmra.mxu0 %v607
      %v745 = vpop.f32.mrf.mxu0
      %v746 = vadd.f32 0.0, %v745
      %v747 = vpop.f32.mrf.mxu0
      %748 = vdwg.mxu0
      %749 = vmatpush.bf16.msra.mxu0 %v710
      %750 = vmatpush.bf16.msra.mxu0 %v707
      %751 = vmatpush.bf16.msra.mxu0 %v704
      %752 = vmatpush.bf16.msra.mxu0 %v701
      %753 = vmatpush.bf16.msra.mxu0 %v698
      %754 = vmatpush.bf16.msra.mxu0 %v695
      %755 = vmatpush.bf16.msra.mxu0 %v692
      %756 = vmatpush.bf16.msra.mxu0 %v689
      %757 = vmatmul.bf16.gmra.mxu0 %v607
      %v758 = vpop.f32.mrf.mxu0
      %v759 = vadd.f32 0.0, %v758
      %v760 = vpop.f32.mrf.mxu0
      %761 = vdwg.mxu0
      %762 = vmatpush.bf16.msra.mxu0 %v711
      %763 = vmatpush.bf16.msra.mxu0 %v708
      %764 = vmatpush.bf16.msra.mxu0 %v705
      %765 = vmatpush.bf16.msra.mxu0 %v702
      %766 = vmatpush.bf16.msra.mxu0 %v699
      %767 = vmatpush.bf16.msra.mxu0 %v696
      %768 = vmatpush.bf16.msra.mxu0 %v693
      %769 = vmatpush.bf16.msra.mxu0 %v690
      %770 = vmatmul.bf16.gmra.mxu0 %v607
      %v771 = vpop.f32.mrf.mxu0
      %v772 = vadd.f32 0.0, %v771
      %v773 = vpop.f32.mrf.mxu0
      %774 = vdwg.mxu0
      %v775 = vadd.f32 %v469, %v746
      %v776 = vadd.f32 %v518, %v759
      %v777 = vxor.u32 %v775, 2147483648
      %v778 = vxor.u32 %v776, 2147483648
      %v779 = vmul.f32 %v777, 1.442695
      %v780 = vpow.pop %v779
      %v781 = vmul.f32 %v778, 1.442695
      %v782 = vpow.pop %v781
      %v783 = vadd.f32 %v780, 1.0
      %v784 = vadd.f32 %v782, 1.0
      %v785 = vrcp.pop %v783
      %v786 = vmul.f32 %v783, %v785
      %v787 = vsub.f32 1.0, %v786
      %v788 = vmul.f32 %v785, %v787
      %v789 = vadd.f32 %v785, %v788
      %vm790 = vweird.f32 %v783
      %vm791 = vweird.f32 %v785
      %vm792 = vmor %vm790, %vm791
      %v793 = vsel %vm792, %v785, %v789
      %v794 = vand.u32 2147483647, %v783
      %vm795 = vcmp.eq.f32.partialorder %v794, 8.507059e+37
      %v796 = vand.u32 %v783, 2147483648
      %v797 = vor.u32 1.1754944e-38, %v796
      %v798 = vsel %vm795, %v797, %v793
      %v799 = vmul.f32 1.0, %v798
      %v800 = vrcp.pop %v784
      %v801 = vmul.f32 %v784, %v800
      %v802 = vsub.f32 1.0, %v801
      %v803 = vmul.f32 %v800, %v802
      %v804 = vadd.f32 %v800, %v803
      %vm805 = vweird.f32 %v784
      %vm806 = vweird.f32 %v800
      %vm807 = vmor %vm805, %vm806
      %v808 = vsel %vm807, %v800, %v804
      %v809 = vand.u32 2147483647, %v784
      %vm810 = vcmp.eq.f32.partialorder %v809, 8.507059e+37
      %v811 = vand.u32 %v784, 2147483648
      %v812 = vor.u32 1.1754944e-38, %v811
      %v813 = vsel %vm810, %v812, %v808
      %v814 = vmul.f32 1.0, %v813
      %v815 = vadd.f32 %v772, %v305
      %v816 = vmul.f32 %v799, %v815
      %v817 = vadd.f32 %v567, %v816
      %v818 = vtanh.pop %v817
      %v819 = vsub.f32 %v606, %v818
      %v820 = vmul.f32 %v814, %v819
      %v821 = vadd.f32 %v818, %v820
      %s822 = smul.u32 %s21, 16
      %p823 = scmp.lt.s32.totalorder %s822, 20
      %s824 = scalar_select %p823, 1, 0
      %v825 = vstv %s824
      %vm826 = vcmp.eq.s32.totalorder %v825, 1
      %v827 = vsel %vm826, %v821, %v606
      %v828 = vpack.c.bf16 %v827, %v827
      %829 = vmatpush.bf16.msra.mxu0 %v709
      %830 = vmatpush.bf16.msra.mxu0 %v706
      %831 = vmatpush.bf16.msra.mxu0 %v703
      %832 = vmatpush.bf16.msra.mxu0 %v700
      %833 = vmatpush.bf16.msra.mxu0 %v697
      %834 = vmatpush.bf16.msra.mxu0 %v694
      %835 = vmatpush.bf16.msra.mxu0 %v691
      %836 = vmatpush.bf16.msra.mxu0 %v688
      %837 = vmatmul.bf16.gmra.mxu0 %v828
      %v838 = vpop.f32.mrf.mxu0
      %v839 = vadd.f32 0.0, %v838
      %v840 = vpop.f32.mrf.mxu0
      %841 = vdwg.mxu0
      %842 = vmatpush.bf16.msra.mxu0 %v710
      %843 = vmatpush.bf16.msra.mxu0 %v707
      %844 = vmatpush.bf16.msra.mxu0 %v704
      %845 = vmatpush.bf16.msra.mxu0 %v701
      %846 = vmatpush.bf16.msra.mxu0 %v698
      %847 = vmatpush.bf16.msra.mxu0 %v695
      %848 = vmatpush.bf16.msra.mxu0 %v692
      %849 = vmatpush.bf16.msra.mxu0 %v689
      %850 = vmatmul.bf16.gmra.mxu0 %v828
      %v851 = vpop.f32.mrf.mxu0
      %v852 = vadd.f32 0.0, %v851
      %v853 = vpop.f32.mrf.mxu0
      %854 = vdwg.mxu0
      %855 = vmatpush.bf16.msra.mxu0 %v711
      %856 = vmatpush.bf16.msra.mxu0 %v708
      %857 = vmatpush.bf16.msra.mxu0 %v705
      %858 = vmatpush.bf16.msra.mxu0 %v702
      %859 = vmatpush.bf16.msra.mxu0 %v699
      %860 = vmatpush.bf16.msra.mxu0 %v696
      %861 = vmatpush.bf16.msra.mxu0 %v693
      %862 = vmatpush.bf16.msra.mxu0 %v690
      %863 = vmatmul.bf16.gmra.mxu0 %v828
      %v864 = vpop.f32.mrf.mxu0
      %v865 = vadd.f32 0.0, %v864
      %v866 = vpop.f32.mrf.mxu0
      %867 = vdwg.mxu0
      %v868 = vadd.f32 %v471, %v839
      %v869 = vadd.f32 %v520, %v852
      %v870 = vxor.u32 %v868, 2147483648
      %v871 = vxor.u32 %v869, 2147483648
      %v872 = vmul.f32 %v870, 1.442695
      %v873 = vpow.pop %v872
      %v874 = vmul.f32 %v871, 1.442695
      %v875 = vpow.pop %v874
      %v876 = vadd.f32 %v873, 1.0
      %v877 = vadd.f32 %v875, 1.0
      %v878 = vrcp.pop %v876
      %v879 = vmul.f32 %v876, %v878
      %v880 = vsub.f32 1.0, %v879
      %v881 = vmul.f32 %v878, %v880
      %v882 = vadd.f32 %v878, %v881
      %vm883 = vweird.f32 %v876
      %vm884 = vweird.f32 %v878
      %vm885 = vmor %vm883, %vm884
      %v886 = vsel %vm885, %v878, %v882
      %v887 = vand.u32 2147483647, %v876
      %vm888 = vcmp.eq.f32.partialorder %v887, 8.507059e+37
      %v889 = vand.u32 %v876, 2147483648
      %v890 = vor.u32 1.1754944e-38, %v889
      %v891 = vsel %vm888, %v890, %v886
      %v892 = vmul.f32 1.0, %v891
      %v893 = vrcp.pop %v877
      %v894 = vmul.f32 %v877, %v893
      %v895 = vsub.f32 1.0, %v894
      %v896 = vmul.f32 %v893, %v895
      %v897 = vadd.f32 %v893, %v896
      %vm898 = vweird.f32 %v877
      %vm899 = vweird.f32 %v893
      %vm900 = vmor %vm898, %vm899
      %v901 = vsel %vm900, %v893, %v897
      %v902 = vand.u32 2147483647, %v877
      %vm903 = vcmp.eq.f32.partialorder %v902, 8.507059e+37
      %v904 = vand.u32 %v877, 2147483648
      %v905 = vor.u32 1.1754944e-38, %v904
      %v906 = vsel %vm903, %v905, %v901
      %v907 = vmul.f32 1.0, %v906
      %v908 = vadd.f32 %v865, %v305
      %v909 = vmul.f32 %v892, %v908
      %v910 = vadd.f32 %v569, %v909
      %v911 = vtanh.pop %v910
      %v912 = vsub.f32 %v827, %v911
      %v913 = vmul.f32 %v907, %v912
      %v914 = vadd.f32 %v911, %v913
      %s915 = sadd.s32 %s822, 1
      %p916 = scmp.lt.s32.totalorder %s915, 20
      %s917 = scalar_select %p916, 1, 0
      %v918 = vstv %s917
      %vm919 = vcmp.eq.s32.totalorder %v918, 1
      %v920 = vsel %vm919, %v914, %v827
      %v921 = vpack.c.bf16 %v920, %v920
      %922 = vmatpush.bf16.msra.mxu0 %v709
      %923 = vmatpush.bf16.msra.mxu0 %v706
      %924 = vmatpush.bf16.msra.mxu0 %v703
      %925 = vmatpush.bf16.msra.mxu0 %v700
      %926 = vmatpush.bf16.msra.mxu0 %v697
      %927 = vmatpush.bf16.msra.mxu0 %v694
      %928 = vmatpush.bf16.msra.mxu0 %v691
      %929 = vmatpush.bf16.msra.mxu0 %v688
      %930 = vmatmul.bf16.gmra.mxu0 %v921
      %v931 = vpop.f32.mrf.mxu0
      %v932 = vadd.f32 0.0, %v931
      %v933 = vpop.f32.mrf.mxu0
      %934 = vdwg.mxu0
      %935 = vmatpush.bf16.msra.mxu0 %v710
      %936 = vmatpush.bf16.msra.mxu0 %v707
      %937 = vmatpush.bf16.msra.mxu0 %v704
      %938 = vmatpush.bf16.msra.mxu0 %v701
      %939 = vmatpush.bf16.msra.mxu0 %v698
      %940 = vmatpush.bf16.msra.mxu0 %v695
      %941 = vmatpush.bf16.msra.mxu0 %v692
      %942 = vmatpush.bf16.msra.mxu0 %v689
      %943 = vmatmul.bf16.gmra.mxu0 %v921
      %v944 = vpop.f32.mrf.mxu0
      %v945 = vadd.f32 0.0, %v944
      %v946 = vpop.f32.mrf.mxu0
      %947 = vdwg.mxu0
      %948 = vmatpush.bf16.msra.mxu0 %v711
      %949 = vmatpush.bf16.msra.mxu0 %v708
      %950 = vmatpush.bf16.msra.mxu0 %v705
      %951 = vmatpush.bf16.msra.mxu0 %v702
      %952 = vmatpush.bf16.msra.mxu0 %v699
      %953 = vmatpush.bf16.msra.mxu0 %v696
      %954 = vmatpush.bf16.msra.mxu0 %v693
      %955 = vmatpush.bf16.msra.mxu0 %v690
      %956 = vmatmul.bf16.gmra.mxu0 %v921
      %v957 = vpop.f32.mrf.mxu0
      %v958 = vadd.f32 0.0, %v957
      %v959 = vpop.f32.mrf.mxu0
      %960 = vdwg.mxu0
      %v961 = vadd.f32 %v474, %v932
      %v962 = vadd.f32 %v523, %v945
      %v963 = vxor.u32 %v961, 2147483648
      %v964 = vxor.u32 %v962, 2147483648
      %v965 = vmul.f32 %v963, 1.442695
      %v966 = vpow.pop %v965
      %v967 = vmul.f32 %v964, 1.442695
      %v968 = vpow.pop %v967
      %v969 = vadd.f32 %v966, 1.0
      %v970 = vadd.f32 %v968, 1.0
      %v971 = vrcp.pop %v969
      %v972 = vmul.f32 %v969, %v971
      %v973 = vsub.f32 1.0, %v972
      %v974 = vmul.f32 %v971, %v973
      %v975 = vadd.f32 %v971, %v974
      %vm976 = vweird.f32 %v969
      %vm977 = vweird.f32 %v971
      %vm978 = vmor %vm976, %vm977
      %v979 = vsel %vm978, %v971, %v975
      %v980 = vand.u32 2147483647, %v969
      %vm981 = vcmp.eq.f32.partialorder %v980, 8.507059e+37
      %v982 = vand.u32 %v969, 2147483648
      %v983 = vor.u32 1.1754944e-38, %v982
      %v984 = vsel %vm981, %v983, %v979
      %v985 = vmul.f32 1.0, %v984
      %v986 = vrcp.pop %v970
      %v987 = vmul.f32 %v970, %v986
      %v988 = vsub.f32 1.0, %v987
      %v989 = vmul.f32 %v986, %v988
      %v990 = vadd.f32 %v986, %v989
      %vm991 = vweird.f32 %v970
      %vm992 = vweird.f32 %v986
      %vm993 = vmor %vm991, %vm992
      %v994 = vsel %vm993, %v986, %v990
      %v995 = vand.u32 2147483647, %v970
      %vm996 = vcmp.eq.f32.partialorder %v995, 8.507059e+37
      %v997 = vand.u32 %v970, 2147483648
      %v998 = vor.u32 1.1754944e-38, %v997
      %v999 = vsel %vm996, %v998, %v994
      %v1000 = vmul.f32 1.0, %v999
      %v1001 = vadd.f32 %v958, %v305
      %v1002 = vmul.f32 %v985, %v1001
      %v1003 = vadd.f32 %v572, %v1002
      %v1004 = vtanh.pop %v1003
      %v1005 = vsub.f32 %v920, %v1004
      %v1006 = vmul.f32 %v1000, %v1005
      %v1007 = vadd.f32 %v1004, %v1006
      %s1008 = sadd.s32 %s822, 2
      %p1009 = scmp.lt.s32.totalorder %s1008, 20
      %s1010 = scalar_select %p1009, 1, 0
      %v1011 = vstv %s1010
      %vm1012 = vcmp.eq.s32.totalorder %v1011, 1
      %v1013 = vsel %vm1012, %v1007, %v920
      %v1014 = vpack.c.bf16 %v1013, %v1013
      %1015 = vmatpush.bf16.msra.mxu0 %v709
      %1016 = vmatpush.bf16.msra.mxu0 %v706
      %1017 = vmatpush.bf16.msra.mxu0 %v703
      %1018 = vmatpush.bf16.msra.mxu0 %v700
      %1019 = vmatpush.bf16.msra.mxu0 %v697
      %1020 = vmatpush.bf16.msra.mxu0 %v694
      %1021 = vmatpush.bf16.msra.mxu0 %v691
      %1022 = vmatpush.bf16.msra.mxu0 %v688
      %1023 = vmatmul.bf16.gmra.mxu0 %v1014
      %v1024 = vpop.f32.mrf.mxu0
      %v1025 = vadd.f32 0.0, %v1024
      %v1026 = vpop.f32.mrf.mxu0
      %1027 = vdwg.mxu0
      %1028 = vmatpush.bf16.msra.mxu0 %v710
      %1029 = vmatpush.bf16.msra.mxu0 %v707
      %1030 = vmatpush.bf16.msra.mxu0 %v704
      %1031 = vmatpush.bf16.msra.mxu0 %v701
      %1032 = vmatpush.bf16.msra.mxu0 %v698
      %1033 = vmatpush.bf16.msra.mxu0 %v695
      %1034 = vmatpush.bf16.msra.mxu0 %v692
      %1035 = vmatpush.bf16.msra.mxu0 %v689
      %1036 = vmatmul.bf16.gmra.mxu0 %v1014
      %v1037 = vpop.f32.mrf.mxu0
      %v1038 = vadd.f32 0.0, %v1037
      %v1039 = vpop.f32.mrf.mxu0
      %1040 = vdwg.mxu0
      %1041 = vmatpush.bf16.msra.mxu0 %v711
      %1042 = vmatpush.bf16.msra.mxu0 %v708
      %1043 = vmatpush.bf16.msra.mxu0 %v705
      %1044 = vmatpush.bf16.msra.mxu0 %v702
      %1045 = vmatpush.bf16.msra.mxu0 %v699
      %1046 = vmatpush.bf16.msra.mxu0 %v696
      %1047 = vmatpush.bf16.msra.mxu0 %v693
      %1048 = vmatpush.bf16.msra.mxu0 %v690
      %1049 = vmatmul.bf16.gmra.mxu0 %v1014
      %v1050 = vpop.f32.mrf.mxu0
      %v1051 = vadd.f32 0.0, %v1050
      %v1052 = vpop.f32.mrf.mxu0
      %1053 = vdwg.mxu0
      %v1054 = vadd.f32 %v476, %v1025
      %v1055 = vadd.f32 %v525, %v1038
      %v1056 = vxor.u32 %v1054, 2147483648
      %v1057 = vxor.u32 %v1055, 2147483648
      %v1058 = vmul.f32 %v1056, 1.442695
      %v1059 = vpow.pop %v1058
      %v1060 = vmul.f32 %v1057, 1.442695
      %v1061 = vpow.pop %v1060
      %v1062 = vadd.f32 %v1059, 1.0
      %v1063 = vadd.f32 %v1061, 1.0
      %v1064 = vrcp.pop %v1062
      %v1065 = vmul.f32 %v1062, %v1064
      %v1066 = vsub.f32 1.0, %v1065
      %v1067 = vmul.f32 %v1064, %v1066
      %v1068 = vadd.f32 %v1064, %v1067
      %vm1069 = vweird.f32 %v1062
      %vm1070 = vweird.f32 %v1064
      %vm1071 = vmor %vm1069, %vm1070
      %v1072 = vsel %vm1071, %v1064, %v1068
      %v1073 = vand.u32 2147483647, %v1062
      %vm1074 = vcmp.eq.f32.partialorder %v1073, 8.507059e+37
      %v1075 = vand.u32 %v1062, 2147483648
      %v1076 = vor.u32 1.1754944e-38, %v1075
      %v1077 = vsel %vm1074, %v1076, %v1072
      %v1078 = vmul.f32 1.0, %v1077
      %v1079 = vrcp.pop %v1063
      %v1080 = vmul.f32 %v1063, %v1079
      %v1081 = vsub.f32 1.0, %v1080
      %v1082 = vmul.f32 %v1079, %v1081
      %v1083 = vadd.f32 %v1079, %v1082
      %vm1084 = vweird.f32 %v1063
      %vm1085 = vweird.f32 %v1079
      %vm1086 = vmor %vm1084, %vm1085
      %v1087 = vsel %vm1086, %v1079, %v1083
      %v1088 = vand.u32 2147483647, %v1063
      %vm1089 = vcmp.eq.f32.partialorder %v1088, 8.507059e+37
      %v1090 = vand.u32 %v1063, 2147483648
      %v1091 = vor.u32 1.1754944e-38, %v1090
      %v1092 = vsel %vm1089, %v1091, %v1087
      %v1093 = vmul.f32 1.0, %v1092
      %v1094 = vadd.f32 %v1051, %v305
      %v1095 = vmul.f32 %v1078, %v1094
      %v1096 = vadd.f32 %v574, %v1095
      %v1097 = vtanh.pop %v1096
      %v1098 = vsub.f32 %v1013, %v1097
      %v1099 = vmul.f32 %v1093, %v1098
      %v1100 = vadd.f32 %v1097, %v1099
      %s1101 = sadd.s32 %s822, 3
      %p1102 = scmp.lt.s32.totalorder %s1101, 20
      %s1103 = scalar_select %p1102, 1, 0
      %v1104 = vstv %s1103
      %vm1105 = vcmp.eq.s32.totalorder %v1104, 1
      %v1106 = vsel %vm1105, %v1100, %v1013
      %v1107 = vpack.c.bf16 %v1106, %v1106
      %1108 = vmatpush.bf16.msra.mxu0 %v709
      %1109 = vmatpush.bf16.msra.mxu0 %v706
      %1110 = vmatpush.bf16.msra.mxu0 %v703
      %1111 = vmatpush.bf16.msra.mxu0 %v700
      %1112 = vmatpush.bf16.msra.mxu0 %v697
      %1113 = vmatpush.bf16.msra.mxu0 %v694
      %1114 = vmatpush.bf16.msra.mxu0 %v691
      %1115 = vmatpush.bf16.msra.mxu0 %v688
      %1116 = vmatmul.bf16.gmra.mxu0 %v1107
      %v1117 = vpop.f32.mrf.mxu0
      %v1118 = vadd.f32 0.0, %v1117
      %v1119 = vpop.f32.mrf.mxu0
      %1120 = vdwg.mxu0
      %1121 = vmatpush.bf16.msra.mxu0 %v710
      %1122 = vmatpush.bf16.msra.mxu0 %v707
      %1123 = vmatpush.bf16.msra.mxu0 %v704
      %1124 = vmatpush.bf16.msra.mxu0 %v701
      %1125 = vmatpush.bf16.msra.mxu0 %v698
      %1126 = vmatpush.bf16.msra.mxu0 %v695
      %1127 = vmatpush.bf16.msra.mxu0 %v692
      %1128 = vmatpush.bf16.msra.mxu0 %v689
      %1129 = vmatmul.bf16.gmra.mxu0 %v1107
      %v1130 = vpop.f32.mrf.mxu0
      %v1131 = vadd.f32 0.0, %v1130
      %v1132 = vpop.f32.mrf.mxu0
      %1133 = vdwg.mxu0
      %1134 = vmatpush.bf16.msra.mxu0 %v711
      %1135 = vmatpush.bf16.msra.mxu0 %v708
      %1136 = vmatpush.bf16.msra.mxu0 %v705
      %1137 = vmatpush.bf16.msra.mxu0 %v702
      %1138 = vmatpush.bf16.msra.mxu0 %v699
      %1139 = vmatpush.bf16.msra.mxu0 %v696
      %1140 = vmatpush.bf16.msra.mxu0 %v693
      %1141 = vmatpush.bf16.msra.mxu0 %v690
      %1142 = vmatmul.bf16.gmra.mxu0 %v1107
      %v1143 = vpop.f32.mrf.mxu0
      %v1144 = vadd.f32 0.0, %v1143
      %v1145 = vpop.f32.mrf.mxu0
      %1146 = vdwg.mxu0
      %v1147 = vadd.f32 %v479, %v1118
      %v1148 = vadd.f32 %v528, %v1131
      %v1149 = vxor.u32 %v1147, 2147483648
      %v1150 = vxor.u32 %v1148, 2147483648
      %v1151 = vmul.f32 %v1149, 1.442695
      %v1152 = vpow.pop %v1151
      %v1153 = vmul.f32 %v1150, 1.442695
      %v1154 = vpow.pop %v1153
      %v1155 = vadd.f32 %v1152, 1.0
      %v1156 = vadd.f32 %v1154, 1.0
      %v1157 = vrcp.pop %v1155
      %v1158 = vmul.f32 %v1155, %v1157
      %v1159 = vsub.f32 1.0, %v1158
      %v1160 = vmul.f32 %v1157, %v1159
      %v1161 = vadd.f32 %v1157, %v1160
      %vm1162 = vweird.f32 %v1155
      %vm1163 = vweird.f32 %v1157
      %vm1164 = vmor %vm1162, %vm1163
      %v1165 = vsel %vm1164, %v1157, %v1161
      %v1166 = vand.u32 2147483647, %v1155
      %vm1167 = vcmp.eq.f32.partialorder %v1166, 8.507059e+37
      %v1168 = vand.u32 %v1155, 2147483648
      %v1169 = vor.u32 1.1754944e-38, %v1168
      %v1170 = vsel %vm1167, %v1169, %v1165
      %v1171 = vmul.f32 1.0, %v1170
      %v1172 = vrcp.pop %v1156
      %v1173 = vmul.f32 %v1156, %v1172
      %v1174 = vsub.f32 1.0, %v1173
      %v1175 = vmul.f32 %v1172, %v1174
      %v1176 = vadd.f32 %v1172, %v1175
      %vm1177 = vweird.f32 %v1156
      %vm1178 = vweird.f32 %v1172
      %vm1179 = vmor %vm1177, %vm1178
      %v1180 = vsel %vm1179, %v1172, %v1176
      %v1181 = vand.u32 2147483647, %v1156
      %vm1182 = vcmp.eq.f32.partialorder %v1181, 8.507059e+37
      %v1183 = vand.u32 %v1156, 2147483648
      %v1184 = vor.u32 1.1754944e-38, %v1183
      %v1185 = vsel %vm1182, %v1184, %v1180
      %v1186 = vmul.f32 1.0, %v1185
      %v1187 = vadd.f32 %v1144, %v305
      %v1188 = vmul.f32 %v1171, %v1187
      %v1189 = vadd.f32 %v577, %v1188
      %v1190 = vtanh.pop %v1189
      %v1191 = vsub.f32 %v1106, %v1190
      %v1192 = vmul.f32 %v1186, %v1191
      %v1193 = vadd.f32 %v1190, %v1192
      %s1194 = sadd.s32 %s822, 4
      %p1195 = scmp.lt.s32.totalorder %s1194, 20
      %s1196 = scalar_select %p1195, 1, 0
      %v1197 = vstv %s1196
      %vm1198 = vcmp.eq.s32.totalorder %v1197, 1
      %v1199 = vsel %vm1198, %v1193, %v1106
      %v1200 = vpack.c.bf16 %v1199, %v1199
      %1201 = vmatpush.bf16.msra.mxu0 %v709
      %1202 = vmatpush.bf16.msra.mxu0 %v706
      %1203 = vmatpush.bf16.msra.mxu0 %v703
      %1204 = vmatpush.bf16.msra.mxu0 %v700
      %1205 = vmatpush.bf16.msra.mxu0 %v697
      %1206 = vmatpush.bf16.msra.mxu0 %v694
      %1207 = vmatpush.bf16.msra.mxu0 %v691
      %1208 = vmatpush.bf16.msra.mxu0 %v688
      %1209 = vmatmul.bf16.gmra.mxu0 %v1200
      %v1210 = vpop.f32.mrf.mxu0
      %v1211 = vadd.f32 0.0, %v1210
      %v1212 = vpop.f32.mrf.mxu0
      %1213 = vdwg.mxu0
      %1214 = vmatpush.bf16.msra.mxu0 %v710
      %1215 = vmatpush.bf16.msra.mxu0 %v707
      %1216 = vmatpush.bf16.msra.mxu0 %v704
      %1217 = vmatpush.bf16.msra.mxu0 %v701
      %1218 = vmatpush.bf16.msra.mxu0 %v698
      %1219 = vmatpush.bf16.msra.mxu0 %v695
      %1220 = vmatpush.bf16.msra.mxu0 %v692
      %1221 = vmatpush.bf16.msra.mxu0 %v689
      %1222 = vmatmul.bf16.gmra.mxu0 %v1200
      %v1223 = vpop.f32.mrf.mxu0
      %v1224 = vadd.f32 0.0, %v1223
      %v1225 = vpop.f32.mrf.mxu0
      %1226 = vdwg.mxu0
      %1227 = vmatpush.bf16.msra.mxu0 %v711
      %1228 = vmatpush.bf16.msra.mxu0 %v708
      %1229 = vmatpush.bf16.msra.mxu0 %v705
      %1230 = vmatpush.bf16.msra.mxu0 %v702
      %1231 = vmatpush.bf16.msra.mxu0 %v699
      %1232 = vmatpush.bf16.msra.mxu0 %v696
      %1233 = vmatpush.bf16.msra.mxu0 %v693
      %1234 = vmatpush.bf16.msra.mxu0 %v690
      %1235 = vmatmul.bf16.gmra.mxu0 %v1200
      %v1236 = vpop.f32.mrf.mxu0
      %v1237 = vadd.f32 0.0, %v1236
      %v1238 = vpop.f32.mrf.mxu0
      %1239 = vdwg.mxu0
      %v1240 = vadd.f32 %v481, %v1211
      %v1241 = vadd.f32 %v530, %v1224
      %v1242 = vxor.u32 %v1240, 2147483648
      %v1243 = vxor.u32 %v1241, 2147483648
      %v1244 = vmul.f32 %v1242, 1.442695
      %v1245 = vpow.pop %v1244
      %v1246 = vmul.f32 %v1243, 1.442695
      %v1247 = vpow.pop %v1246
      %v1248 = vadd.f32 %v1245, 1.0
      %v1249 = vadd.f32 %v1247, 1.0
      %v1250 = vrcp.pop %v1248
      %v1251 = vmul.f32 %v1248, %v1250
      %v1252 = vsub.f32 1.0, %v1251
      %v1253 = vmul.f32 %v1250, %v1252
      %v1254 = vadd.f32 %v1250, %v1253
      %vm1255 = vweird.f32 %v1248
      %vm1256 = vweird.f32 %v1250
      %vm1257 = vmor %vm1255, %vm1256
      %v1258 = vsel %vm1257, %v1250, %v1254
      %v1259 = vand.u32 2147483647, %v1248
      %vm1260 = vcmp.eq.f32.partialorder %v1259, 8.507059e+37
      %v1261 = vand.u32 %v1248, 2147483648
      %v1262 = vor.u32 1.1754944e-38, %v1261
      %v1263 = vsel %vm1260, %v1262, %v1258
      %v1264 = vmul.f32 1.0, %v1263
      %v1265 = vrcp.pop %v1249
      %v1266 = vmul.f32 %v1249, %v1265
      %v1267 = vsub.f32 1.0, %v1266
      %v1268 = vmul.f32 %v1265, %v1267
      %v1269 = vadd.f32 %v1265, %v1268
      %vm1270 = vweird.f32 %v1249
      %vm1271 = vweird.f32 %v1265
      %vm1272 = vmor %vm1270, %vm1271
      %v1273 = vsel %vm1272, %v1265, %v1269
      %v1274 = vand.u32 2147483647, %v1249
      %vm1275 = vcmp.eq.f32.partialorder %v1274, 8.507059e+37
      %v1276 = vand.u32 %v1249, 2147483648
      %v1277 = vor.u32 1.1754944e-38, %v1276
      %v1278 = vsel %vm1275, %v1277, %v1273
      %v1279 = vmul.f32 1.0, %v1278
      %v1280 = vadd.f32 %v1237, %v305
      %v1281 = vmul.f32 %v1264, %v1280
      %v1282 = vadd.f32 %v579, %v1281
      %v1283 = vtanh.pop %v1282
      %v1284 = vsub.f32 %v1199, %v1283
      %v1285 = vmul.f32 %v1279, %v1284
      %v1286 = vadd.f32 %v1283, %v1285
      %s1287 = sadd.s32 %s822, 5
      %p1288 = scmp.lt.s32.totalorder %s1287, 20
      %s1289 = scalar_select %p1288, 1, 0
      %v1290 = vstv %s1289
      %vm1291 = vcmp.eq.s32.totalorder %v1290, 1
      %v1292 = vsel %vm1291, %v1286, %v1199
      %v1293 = vpack.c.bf16 %v1292, %v1292
      %1294 = vmatpush.bf16.msra.mxu0 %v709
      %1295 = vmatpush.bf16.msra.mxu0 %v706
      %1296 = vmatpush.bf16.msra.mxu0 %v703
      %1297 = vmatpush.bf16.msra.mxu0 %v700
      %1298 = vmatpush.bf16.msra.mxu0 %v697
      %1299 = vmatpush.bf16.msra.mxu0 %v694
      %1300 = vmatpush.bf16.msra.mxu0 %v691
      %1301 = vmatpush.bf16.msra.mxu0 %v688
      %1302 = vmatmul.bf16.gmra.mxu0 %v1293
      %v1303 = vpop.f32.mrf.mxu0
      %v1304 = vadd.f32 0.0, %v1303
      %v1305 = vpop.f32.mrf.mxu0
      %1306 = vdwg.mxu0
      %1307 = vmatpush.bf16.msra.mxu0 %v710
      %1308 = vmatpush.bf16.msra.mxu0 %v707
      %1309 = vmatpush.bf16.msra.mxu0 %v704
      %1310 = vmatpush.bf16.msra.mxu0 %v701
      %1311 = vmatpush.bf16.msra.mxu0 %v698
      %1312 = vmatpush.bf16.msra.mxu0 %v695
      %1313 = vmatpush.bf16.msra.mxu0 %v692
      %1314 = vmatpush.bf16.msra.mxu0 %v689
      %1315 = vmatmul.bf16.gmra.mxu0 %v1293
      %v1316 = vpop.f32.mrf.mxu0
      %v1317 = vadd.f32 0.0, %v1316
      %v1318 = vpop.f32.mrf.mxu0
      %1319 = vdwg.mxu0
      %1320 = vmatpush.bf16.msra.mxu0 %v711
      %1321 = vmatpush.bf16.msra.mxu0 %v708
      %1322 = vmatpush.bf16.msra.mxu0 %v705
      %1323 = vmatpush.bf16.msra.mxu0 %v702
      %1324 = vmatpush.bf16.msra.mxu0 %v699
      %1325 = vmatpush.bf16.msra.mxu0 %v696
      %1326 = vmatpush.bf16.msra.mxu0 %v693
      %1327 = vmatpush.bf16.msra.mxu0 %v690
      %1328 = vmatmul.bf16.gmra.mxu0 %v1293
      %v1329 = vpop.f32.mrf.mxu0
      %v1330 = vadd.f32 0.0, %v1329
      %v1331 = vpop.f32.mrf.mxu0
      %1332 = vdwg.mxu0
      %v1333 = vadd.f32 %v484, %v1304
      %v1334 = vadd.f32 %v533, %v1317
      %v1335 = vxor.u32 %v1333, 2147483648
      %v1336 = vxor.u32 %v1334, 2147483648
      %v1337 = vmul.f32 %v1335, 1.442695
      %v1338 = vpow.pop %v1337
      %v1339 = vmul.f32 %v1336, 1.442695
      %v1340 = vpow.pop %v1339
      %v1341 = vadd.f32 %v1338, 1.0
      %v1342 = vadd.f32 %v1340, 1.0
      %v1343 = vrcp.pop %v1341
      %v1344 = vmul.f32 %v1341, %v1343
      %v1345 = vsub.f32 1.0, %v1344
      %v1346 = vmul.f32 %v1343, %v1345
      %v1347 = vadd.f32 %v1343, %v1346
      %vm1348 = vweird.f32 %v1341
      %vm1349 = vweird.f32 %v1343
      %vm1350 = vmor %vm1348, %vm1349
      %v1351 = vsel %vm1350, %v1343, %v1347
      %v1352 = vand.u32 2147483647, %v1341
      %vm1353 = vcmp.eq.f32.partialorder %v1352, 8.507059e+37
      %v1354 = vand.u32 %v1341, 2147483648
      %v1355 = vor.u32 1.1754944e-38, %v1354
      %v1356 = vsel %vm1353, %v1355, %v1351
      %v1357 = vmul.f32 1.0, %v1356
      %v1358 = vrcp.pop %v1342
      %v1359 = vmul.f32 %v1342, %v1358
      %v1360 = vsub.f32 1.0, %v1359
      %v1361 = vmul.f32 %v1358, %v1360
      %v1362 = vadd.f32 %v1358, %v1361
      %vm1363 = vweird.f32 %v1342
      %vm1364 = vweird.f32 %v1358
      %vm1365 = vmor %vm1363, %vm1364
      %v1366 = vsel %vm1365, %v1358, %v1362
      %v1367 = vand.u32 2147483647, %v1342
      %vm1368 = vcmp.eq.f32.partialorder %v1367, 8.507059e+37
      %v1369 = vand.u32 %v1342, 2147483648
      %v1370 = vor.u32 1.1754944e-38, %v1369
      %v1371 = vsel %vm1368, %v1370, %v1366
      %v1372 = vmul.f32 1.0, %v1371
      %v1373 = vadd.f32 %v1330, %v305
      %v1374 = vmul.f32 %v1357, %v1373
      %v1375 = vadd.f32 %v582, %v1374
      %v1376 = vtanh.pop %v1375
      %v1377 = vsub.f32 %v1292, %v1376
      %v1378 = vmul.f32 %v1372, %v1377
      %v1379 = vadd.f32 %v1376, %v1378
      %s1380 = sadd.s32 %s822, 6
      %p1381 = scmp.lt.s32.totalorder %s1380, 20
      %s1382 = scalar_select %p1381, 1, 0
      %v1383 = vstv %s1382
      %vm1384 = vcmp.eq.s32.totalorder %v1383, 1
      %v1385 = vsel %vm1384, %v1379, %v1292
      %v1386 = vpack.c.bf16 %v1385, %v1385
      %1387 = vmatpush.bf16.msra.mxu0 %v709
      %1388 = vmatpush.bf16.msra.mxu0 %v706
      %1389 = vmatpush.bf16.msra.mxu0 %v703
      %1390 = vmatpush.bf16.msra.mxu0 %v700
      %1391 = vmatpush.bf16.msra.mxu0 %v697
      %1392 = vmatpush.bf16.msra.mxu0 %v694
      %1393 = vmatpush.bf16.msra.mxu0 %v691
      %1394 = vmatpush.bf16.msra.mxu0 %v688
      %1395 = vmatmul.bf16.gmra.mxu0 %v1386
      %v1396 = vpop.f32.mrf.mxu0
      %v1397 = vadd.f32 0.0, %v1396
      %v1398 = vpop.f32.mrf.mxu0
      %1399 = vdwg.mxu0
      %1400 = vmatpush.bf16.msra.mxu0 %v710
      %1401 = vmatpush.bf16.msra.mxu0 %v707
      %1402 = vmatpush.bf16.msra.mxu0 %v704
      %1403 = vmatpush.bf16.msra.mxu0 %v701
      %1404 = vmatpush.bf16.msra.mxu0 %v698
      %1405 = vmatpush.bf16.msra.mxu0 %v695
      %1406 = vmatpush.bf16.msra.mxu0 %v692
      %1407 = vmatpush.bf16.msra.mxu0 %v689
      %1408 = vmatmul.bf16.gmra.mxu0 %v1386
      %v1409 = vpop.f32.mrf.mxu0
      %v1410 = vadd.f32 0.0, %v1409
      %v1411 = vpop.f32.mrf.mxu0
      %1412 = vdwg.mxu0
      %1413 = vmatpush.bf16.msra.mxu0 %v711
      %1414 = vmatpush.bf16.msra.mxu0 %v708
      %1415 = vmatpush.bf16.msra.mxu0 %v705
      %1416 = vmatpush.bf16.msra.mxu0 %v702
      %1417 = vmatpush.bf16.msra.mxu0 %v699
      %1418 = vmatpush.bf16.msra.mxu0 %v696
      %1419 = vmatpush.bf16.msra.mxu0 %v693
      %1420 = vmatpush.bf16.msra.mxu0 %v690
      %1421 = vmatmul.bf16.gmra.mxu0 %v1386
      %v1422 = vpop.f32.mrf.mxu0
      %v1423 = vadd.f32 0.0, %v1422
      %v1424 = vpop.f32.mrf.mxu0
      %1425 = vdwg.mxu0
      %v1426 = vadd.f32 %v486, %v1397
      %v1427 = vadd.f32 %v535, %v1410
      %v1428 = vxor.u32 %v1426, 2147483648
      %v1429 = vxor.u32 %v1427, 2147483648
      %v1430 = vmul.f32 %v1428, 1.442695
      %v1431 = vpow.pop %v1430
      %v1432 = vmul.f32 %v1429, 1.442695
      %v1433 = vpow.pop %v1432
      %v1434 = vadd.f32 %v1431, 1.0
      %v1435 = vadd.f32 %v1433, 1.0
      %v1436 = vrcp.pop %v1434
      %v1437 = vmul.f32 %v1434, %v1436
      %v1438 = vsub.f32 1.0, %v1437
      %v1439 = vmul.f32 %v1436, %v1438
      %v1440 = vadd.f32 %v1436, %v1439
      %vm1441 = vweird.f32 %v1434
      %vm1442 = vweird.f32 %v1436
      %vm1443 = vmor %vm1441, %vm1442
      %v1444 = vsel %vm1443, %v1436, %v1440
      %v1445 = vand.u32 2147483647, %v1434
      %vm1446 = vcmp.eq.f32.partialorder %v1445, 8.507059e+37
      %v1447 = vand.u32 %v1434, 2147483648
      %v1448 = vor.u32 1.1754944e-38, %v1447
      %v1449 = vsel %vm1446, %v1448, %v1444
      %v1450 = vmul.f32 1.0, %v1449
      %v1451 = vrcp.pop %v1435
      %v1452 = vmul.f32 %v1435, %v1451
      %v1453 = vsub.f32 1.0, %v1452
      %v1454 = vmul.f32 %v1451, %v1453
      %v1455 = vadd.f32 %v1451, %v1454
      %vm1456 = vweird.f32 %v1435
      %vm1457 = vweird.f32 %v1451
      %vm1458 = vmor %vm1456, %vm1457
      %v1459 = vsel %vm1458, %v1451, %v1455
      %v1460 = vand.u32 2147483647, %v1435
      %vm1461 = vcmp.eq.f32.partialorder %v1460, 8.507059e+37
      %v1462 = vand.u32 %v1435, 2147483648
      %v1463 = vor.u32 1.1754944e-38, %v1462
      %v1464 = vsel %vm1461, %v1463, %v1459
      %v1465 = vmul.f32 1.0, %v1464
      %v1466 = vadd.f32 %v1423, %v305
      %v1467 = vmul.f32 %v1450, %v1466
      %v1468 = vadd.f32 %v584, %v1467
      %v1469 = vtanh.pop %v1468
      %v1470 = vsub.f32 %v1385, %v1469
      %v1471 = vmul.f32 %v1465, %v1470
      %v1472 = vadd.f32 %v1469, %v1471
      %s1473 = sadd.s32 %s822, 7
      %p1474 = scmp.lt.s32.totalorder %s1473, 20
      %s1475 = scalar_select %p1474, 1, 0
      %v1476 = vstv %s1475
      %vm1477 = vcmp.eq.s32.totalorder %v1476, 1
      %v1478 = vsel %vm1477, %v1472, %v1385
      %v1479 = vpack.c.bf16 %v1478, %v1478
      %1480 = vmatpush.bf16.msra.mxu0 %v709
      %1481 = vmatpush.bf16.msra.mxu0 %v706
      %1482 = vmatpush.bf16.msra.mxu0 %v703
      %1483 = vmatpush.bf16.msra.mxu0 %v700
      %1484 = vmatpush.bf16.msra.mxu0 %v697
      %1485 = vmatpush.bf16.msra.mxu0 %v694
      %1486 = vmatpush.bf16.msra.mxu0 %v691
      %1487 = vmatpush.bf16.msra.mxu0 %v688
      %1488 = vmatmul.bf16.gmra.mxu0 %v1479
      %v1489 = vpop.f32.mrf.mxu0
      %v1490 = vadd.f32 0.0, %v1489
      %v1491 = vpop.f32.mrf.mxu0
      %1492 = vdwg.mxu0
      %1493 = vmatpush.bf16.msra.mxu0 %v710
      %1494 = vmatpush.bf16.msra.mxu0 %v707
      %1495 = vmatpush.bf16.msra.mxu0 %v704
      %1496 = vmatpush.bf16.msra.mxu0 %v701
      %1497 = vmatpush.bf16.msra.mxu0 %v698
      %1498 = vmatpush.bf16.msra.mxu0 %v695
      %1499 = vmatpush.bf16.msra.mxu0 %v692
      %1500 = vmatpush.bf16.msra.mxu0 %v689
      %1501 = vmatmul.bf16.gmra.mxu0 %v1479
      %v1502 = vpop.f32.mrf.mxu0
      %v1503 = vadd.f32 0.0, %v1502
      %v1504 = vpop.f32.mrf.mxu0
      %1505 = vdwg.mxu0
      %1506 = vmatpush.bf16.msra.mxu0 %v711
      %1507 = vmatpush.bf16.msra.mxu0 %v708
      %1508 = vmatpush.bf16.msra.mxu0 %v705
      %1509 = vmatpush.bf16.msra.mxu0 %v702
      %1510 = vmatpush.bf16.msra.mxu0 %v699
      %1511 = vmatpush.bf16.msra.mxu0 %v696
      %1512 = vmatpush.bf16.msra.mxu0 %v693
      %1513 = vmatpush.bf16.msra.mxu0 %v690
      %1514 = vmatmul.bf16.gmra.mxu0 %v1479
      %v1515 = vpop.f32.mrf.mxu0
      %v1516 = vadd.f32 0.0, %v1515
      %v1517 = vpop.f32.mrf.mxu0
      %1518 = vdwg.mxu0
      %v1519 = vadd.f32 %v489, %v1490
      %v1520 = vadd.f32 %v538, %v1503
      %v1521 = vxor.u32 %v1519, 2147483648
      %v1522 = vxor.u32 %v1520, 2147483648
      %v1523 = vmul.f32 %v1521, 1.442695
      %v1524 = vpow.pop %v1523
      %v1525 = vmul.f32 %v1522, 1.442695
      %v1526 = vpow.pop %v1525
      %v1527 = vadd.f32 %v1524, 1.0
      %v1528 = vadd.f32 %v1526, 1.0
      %v1529 = vrcp.pop %v1527
      %v1530 = vmul.f32 %v1527, %v1529
      %v1531 = vsub.f32 1.0, %v1530
      %v1532 = vmul.f32 %v1529, %v1531
      %v1533 = vadd.f32 %v1529, %v1532
      %vm1534 = vweird.f32 %v1527
      %vm1535 = vweird.f32 %v1529
      %vm1536 = vmor %vm1534, %vm1535
      %v1537 = vsel %vm1536, %v1529, %v1533
      %v1538 = vand.u32 2147483647, %v1527
      %vm1539 = vcmp.eq.f32.partialorder %v1538, 8.507059e+37
      %v1540 = vand.u32 %v1527, 2147483648
      %v1541 = vor.u32 1.1754944e-38, %v1540
      %v1542 = vsel %vm1539, %v1541, %v1537
      %v1543 = vmul.f32 1.0, %v1542
      %v1544 = vrcp.pop %v1528
      %v1545 = vmul.f32 %v1528, %v1544
      %v1546 = vsub.f32 1.0, %v1545
      %v1547 = vmul.f32 %v1544, %v1546
      %v1548 = vadd.f32 %v1544, %v1547
      %vm1549 = vweird.f32 %v1528
      %vm1550 = vweird.f32 %v1544
      %vm1551 = vmor %vm1549, %vm1550
      %v1552 = vsel %vm1551, %v1544, %v1548
      %v1553 = vand.u32 2147483647, %v1528
      %vm1554 = vcmp.eq.f32.partialorder %v1553, 8.507059e+37
      %v1555 = vand.u32 %v1528, 2147483648
      %v1556 = vor.u32 1.1754944e-38, %v1555
      %v1557 = vsel %vm1554, %v1556, %v1552
      %v1558 = vmul.f32 1.0, %v1557
      %v1559 = vadd.f32 %v1516, %v305
      %v1560 = vmul.f32 %v1543, %v1559
      %v1561 = vadd.f32 %v587, %v1560
      %v1562 = vtanh.pop %v1561
      %v1563 = vsub.f32 %v1478, %v1562
      %v1564 = vmul.f32 %v1558, %v1563
      %v1565 = vadd.f32 %v1562, %v1564
      %s1566 = sadd.s32 %s822, 8
      %p1567 = scmp.lt.s32.totalorder %s1566, 20
      %s1568 = scalar_select %p1567, 1, 0
      %v1569 = vstv %s1568
      %vm1570 = vcmp.eq.s32.totalorder %v1569, 1
      %v1571 = vsel %vm1570, %v1565, %v1478
      %v1572 = vpack.c.bf16 %v1571, %v1571
      %1573 = vmatpush.bf16.msra.mxu0 %v709
      %1574 = vmatpush.bf16.msra.mxu0 %v706
      %1575 = vmatpush.bf16.msra.mxu0 %v703
      %1576 = vmatpush.bf16.msra.mxu0 %v700
      %1577 = vmatpush.bf16.msra.mxu0 %v697
      %1578 = vmatpush.bf16.msra.mxu0 %v694
      %1579 = vmatpush.bf16.msra.mxu0 %v691
      %1580 = vmatpush.bf16.msra.mxu0 %v688
      %1581 = vmatmul.bf16.gmra.mxu0 %v1572
      %v1582 = vpop.f32.mrf.mxu0
      %v1583 = vadd.f32 0.0, %v1582
      %v1584 = vpop.f32.mrf.mxu0
      %1585 = vdwg.mxu0
      %1586 = vmatpush.bf16.msra.mxu0 %v710
      %1587 = vmatpush.bf16.msra.mxu0 %v707
      %1588 = vmatpush.bf16.msra.mxu0 %v704
      %1589 = vmatpush.bf16.msra.mxu0 %v701
      %1590 = vmatpush.bf16.msra.mxu0 %v698
      %1591 = vmatpush.bf16.msra.mxu0 %v695
      %1592 = vmatpush.bf16.msra.mxu0 %v692
      %1593 = vmatpush.bf16.msra.mxu0 %v689
      %1594 = vmatmul.bf16.gmra.mxu0 %v1572
      %v1595 = vpop.f32.mrf.mxu0
      %v1596 = vadd.f32 0.0, %v1595
      %v1597 = vpop.f32.mrf.mxu0
      %1598 = vdwg.mxu0
      %1599 = vmatpush.bf16.msra.mxu0 %v711
      %1600 = vmatpush.bf16.msra.mxu0 %v708
      %1601 = vmatpush.bf16.msra.mxu0 %v705
      %1602 = vmatpush.bf16.msra.mxu0 %v702
      %1603 = vmatpush.bf16.msra.mxu0 %v699
      %1604 = vmatpush.bf16.msra.mxu0 %v696
      %1605 = vmatpush.bf16.msra.mxu0 %v693
      %1606 = vmatpush.bf16.msra.mxu0 %v690
      %1607 = vmatmul.bf16.gmra.mxu0 %v1572
      %v1608 = vpop.f32.mrf.mxu0
      %v1609 = vadd.f32 0.0, %v1608
      %v1610 = vpop.f32.mrf.mxu0
      %1611 = vdwg.mxu0
      %v1612 = vadd.f32 %v491, %v1583
      %v1613 = vadd.f32 %v540, %v1596
      %v1614 = vxor.u32 %v1612, 2147483648
      %v1615 = vxor.u32 %v1613, 2147483648
      %v1616 = vmul.f32 %v1614, 1.442695
      %v1617 = vpow.pop %v1616
      %v1618 = vmul.f32 %v1615, 1.442695
      %v1619 = vpow.pop %v1618
      %v1620 = vadd.f32 %v1617, 1.0
      %v1621 = vadd.f32 %v1619, 1.0
      %v1622 = vrcp.pop %v1620
      %v1623 = vmul.f32 %v1620, %v1622
      %v1624 = vsub.f32 1.0, %v1623
      %v1625 = vmul.f32 %v1622, %v1624
      %v1626 = vadd.f32 %v1622, %v1625
      %vm1627 = vweird.f32 %v1620
      %vm1628 = vweird.f32 %v1622
      %vm1629 = vmor %vm1627, %vm1628
      %v1630 = vsel %vm1629, %v1622, %v1626
      %v1631 = vand.u32 2147483647, %v1620
      %vm1632 = vcmp.eq.f32.partialorder %v1631, 8.507059e+37
      %v1633 = vand.u32 %v1620, 2147483648
      %v1634 = vor.u32 1.1754944e-38, %v1633
      %v1635 = vsel %vm1632, %v1634, %v1630
      %v1636 = vmul.f32 1.0, %v1635
      %v1637 = vrcp.pop %v1621
      %v1638 = vmul.f32 %v1621, %v1637
      %v1639 = vsub.f32 1.0, %v1638
      %v1640 = vmul.f32 %v1637, %v1639
      %v1641 = vadd.f32 %v1637, %v1640
      %vm1642 = vweird.f32 %v1621
      %vm1643 = vweird.f32 %v1637
      %vm1644 = vmor %vm1642, %vm1643
      %v1645 = vsel %vm1644, %v1637, %v1641
      %v1646 = vand.u32 2147483647, %v1621
      %vm1647 = vcmp.eq.f32.partialorder %v1646, 8.507059e+37
      %v1648 = vand.u32 %v1621, 2147483648
      %v1649 = vor.u32 1.1754944e-38, %v1648
      %v1650 = vsel %vm1647, %v1649, %v1645
      %v1651 = vmul.f32 1.0, %v1650
      %v1652 = vadd.f32 %v1609, %v305
      %v1653 = vmul.f32 %v1636, %v1652
      %v1654 = vadd.f32 %v589, %v1653
      %v1655 = vtanh.pop %v1654
      %v1656 = vsub.f32 %v1571, %v1655
      %v1657 = vmul.f32 %v1651, %v1656
      %v1658 = vadd.f32 %v1655, %v1657
      %s1659 = sadd.s32 %s822, 9
      %p1660 = scmp.lt.s32.totalorder %s1659, 20
      %s1661 = scalar_select %p1660, 1, 0
      %v1662 = vstv %s1661
      %vm1663 = vcmp.eq.s32.totalorder %v1662, 1
      %v1664 = vsel %vm1663, %v1658, %v1571
      %v1665 = vpack.c.bf16 %v1664, %v1664
      %1666 = vmatpush.bf16.msra.mxu0 %v709
      %1667 = vmatpush.bf16.msra.mxu0 %v706
      %1668 = vmatpush.bf16.msra.mxu0 %v703
      %1669 = vmatpush.bf16.msra.mxu0 %v700
      %1670 = vmatpush.bf16.msra.mxu0 %v697
      %1671 = vmatpush.bf16.msra.mxu0 %v694
      %1672 = vmatpush.bf16.msra.mxu0 %v691
      %1673 = vmatpush.bf16.msra.mxu0 %v688
      %1674 = vmatmul.bf16.gmra.mxu0 %v1665
      %v1675 = vpop.f32.mrf.mxu0
      %v1676 = vadd.f32 0.0, %v1675
      %v1677 = vpop.f32.mrf.mxu0
      %1678 = vdwg.mxu0
      %1679 = vmatpush.bf16.msra.mxu0 %v710
      %1680 = vmatpush.bf16.msra.mxu0 %v707
      %1681 = vmatpush.bf16.msra.mxu0 %v704
      %1682 = vmatpush.bf16.msra.mxu0 %v701
      %1683 = vmatpush.bf16.msra.mxu0 %v698
      %1684 = vmatpush.bf16.msra.mxu0 %v695
      %1685 = vmatpush.bf16.msra.mxu0 %v692
      %1686 = vmatpush.bf16.msra.mxu0 %v689
      %1687 = vmatmul.bf16.gmra.mxu0 %v1665
      %v1688 = vpop.f32.mrf.mxu0
      %v1689 = vadd.f32 0.0, %v1688
      %v1690 = vpop.f32.mrf.mxu0
      %1691 = vdwg.mxu0
      %1692 = vmatpush.bf16.msra.mxu0 %v711
      %1693 = vmatpush.bf16.msra.mxu0 %v708
      %1694 = vmatpush.bf16.msra.mxu0 %v705
      %1695 = vmatpush.bf16.msra.mxu0 %v702
      %1696 = vmatpush.bf16.msra.mxu0 %v699
      %1697 = vmatpush.bf16.msra.mxu0 %v696
      %1698 = vmatpush.bf16.msra.mxu0 %v693
      %1699 = vmatpush.bf16.msra.mxu0 %v690
      %1700 = vmatmul.bf16.gmra.mxu0 %v1665
      %v1701 = vpop.f32.mrf.mxu0
      %v1702 = vadd.f32 0.0, %v1701
      %v1703 = vpop.f32.mrf.mxu0
      %1704 = vdwg.mxu0
      %v1705 = vadd.f32 %v494, %v1676
      %v1706 = vadd.f32 %v543, %v1689
      %v1707 = vxor.u32 %v1705, 2147483648
      %v1708 = vxor.u32 %v1706, 2147483648
      %v1709 = vmul.f32 %v1707, 1.442695
      %v1710 = vpow.pop %v1709
      %v1711 = vmul.f32 %v1708, 1.442695
      %v1712 = vpow.pop %v1711
      %v1713 = vadd.f32 %v1710, 1.0
      %v1714 = vadd.f32 %v1712, 1.0
      %v1715 = vrcp.pop %v1713
      %v1716 = vmul.f32 %v1713, %v1715
      %v1717 = vsub.f32 1.0, %v1716
      %v1718 = vmul.f32 %v1715, %v1717
      %v1719 = vadd.f32 %v1715, %v1718
      %vm1720 = vweird.f32 %v1713
      %vm1721 = vweird.f32 %v1715
      %vm1722 = vmor %vm1720, %vm1721
      %v1723 = vsel %vm1722, %v1715, %v1719
      %v1724 = vand.u32 2147483647, %v1713
      %vm1725 = vcmp.eq.f32.partialorder %v1724, 8.507059e+37
      %v1726 = vand.u32 %v1713, 2147483648
      %v1727 = vor.u32 1.1754944e-38, %v1726
      %v1728 = vsel %vm1725, %v1727, %v1723
      %v1729 = vmul.f32 1.0, %v1728
      %v1730 = vrcp.pop %v1714
      %v1731 = vmul.f32 %v1714, %v1730
      %v1732 = vsub.f32 1.0, %v1731
      %v1733 = vmul.f32 %v1730, %v1732
      %v1734 = vadd.f32 %v1730, %v1733
      %vm1735 = vweird.f32 %v1714
      %vm1736 = vweird.f32 %v1730
      %vm1737 = vmor %vm1735, %vm1736
      %v1738 = vsel %vm1737, %v1730, %v1734
      %v1739 = vand.u32 2147483647, %v1714
      %vm1740 = vcmp.eq.f32.partialorder %v1739, 8.507059e+37
      %v1741 = vand.u32 %v1714, 2147483648
      %v1742 = vor.u32 1.1754944e-38, %v1741
      %v1743 = vsel %vm1740, %v1742, %v1738
      %v1744 = vmul.f32 1.0, %v1743
      %v1745 = vadd.f32 %v1702, %v305
      %v1746 = vmul.f32 %v1729, %v1745
      %v1747 = vadd.f32 %v592, %v1746
      %v1748 = vtanh.pop %v1747
      %v1749 = vsub.f32 %v1664, %v1748
      %v1750 = vmul.f32 %v1744, %v1749
      %v1751 = vadd.f32 %v1748, %v1750
      %s1752 = sadd.s32 %s822, 10
      %p1753 = scmp.lt.s32.totalorder %s1752, 20
      %s1754 = scalar_select %p1753, 1, 0
      %v1755 = vstv %s1754
      %vm1756 = vcmp.eq.s32.totalorder %v1755, 1
      %v1757 = vsel %vm1756, %v1751, %v1664
      %v1758 = vpack.c.bf16 %v1757, %v1757
      %1759 = vmatpush.bf16.msra.mxu0 %v709
      %1760 = vmatpush.bf16.msra.mxu0 %v706
      %1761 = vmatpush.bf16.msra.mxu0 %v703
      %1762 = vmatpush.bf16.msra.mxu0 %v700
      %1763 = vmatpush.bf16.msra.mxu0 %v697
      %1764 = vmatpush.bf16.msra.mxu0 %v694
      %1765 = vmatpush.bf16.msra.mxu0 %v691
      %1766 = vmatpush.bf16.msra.mxu0 %v688
      %1767 = vmatmul.bf16.gmra.mxu0 %v1758
      %v1768 = vpop.f32.mrf.mxu0
      %v1769 = vadd.f32 0.0, %v1768
      %v1770 = vpop.f32.mrf.mxu0
      %1771 = vdwg.mxu0
      %1772 = vmatpush.bf16.msra.mxu0 %v710
      %1773 = vmatpush.bf16.msra.mxu0 %v707
      %1774 = vmatpush.bf16.msra.mxu0 %v704
      %1775 = vmatpush.bf16.msra.mxu0 %v701
      %1776 = vmatpush.bf16.msra.mxu0 %v698
      %1777 = vmatpush.bf16.msra.mxu0 %v695
      %1778 = vmatpush.bf16.msra.mxu0 %v692
      %1779 = vmatpush.bf16.msra.mxu0 %v689
      %1780 = vmatmul.bf16.gmra.mxu0 %v1758
      %v1781 = vpop.f32.mrf.mxu0
      %v1782 = vadd.f32 0.0, %v1781
      %v1783 = vpop.f32.mrf.mxu0
      %1784 = vdwg.mxu0
      %1785 = vmatpush.bf16.msra.mxu0 %v711
      %1786 = vmatpush.bf16.msra.mxu0 %v708
      %1787 = vmatpush.bf16.msra.mxu0 %v705
      %1788 = vmatpush.bf16.msra.mxu0 %v702
      %1789 = vmatpush.bf16.msra.mxu0 %v699
      %1790 = vmatpush.bf16.msra.mxu0 %v696
      %1791 = vmatpush.bf16.msra.mxu0 %v693
      %1792 = vmatpush.bf16.msra.mxu0 %v690
      %1793 = vmatmul.bf16.gmra.mxu0 %v1758
      %v1794 = vpop.f32.mrf.mxu0
      %v1795 = vadd.f32 0.0, %v1794
      %v1796 = vpop.f32.mrf.mxu0
      %1797 = vdwg.mxu0
      %v1798 = vadd.f32 %v496, %v1769
      %v1799 = vadd.f32 %v545, %v1782
      %v1800 = vxor.u32 %v1798, 2147483648
      %v1801 = vxor.u32 %v1799, 2147483648
      %v1802 = vmul.f32 %v1800, 1.442695
      %v1803 = vpow.pop %v1802
      %v1804 = vmul.f32 %v1801, 1.442695
      %v1805 = vpow.pop %v1804
      %v1806 = vadd.f32 %v1803, 1.0
      %v1807 = vadd.f32 %v1805, 1.0
      %v1808 = vrcp.pop %v1806
      %v1809 = vmul.f32 %v1806, %v1808
      %v1810 = vsub.f32 1.0, %v1809
      %v1811 = vmul.f32 %v1808, %v1810
      %v1812 = vadd.f32 %v1808, %v1811
      %vm1813 = vweird.f32 %v1806
      %vm1814 = vweird.f32 %v1808
      %vm1815 = vmor %vm1813, %vm1814
      %v1816 = vsel %vm1815, %v1808, %v1812
      %v1817 = vand.u32 2147483647, %v1806
      %vm1818 = vcmp.eq.f32.partialorder %v1817, 8.507059e+37
      %v1819 = vand.u32 %v1806, 2147483648
      %v1820 = vor.u32 1.1754944e-38, %v1819
      %v1821 = vsel %vm1818, %v1820, %v1816
      %v1822 = vmul.f32 1.0, %v1821
      %v1823 = vrcp.pop %v1807
      %v1824 = vmul.f32 %v1807, %v1823
      %v1825 = vsub.f32 1.0, %v1824
      %v1826 = vmul.f32 %v1823, %v1825
      %v1827 = vadd.f32 %v1823, %v1826
      %vm1828 = vweird.f32 %v1807
      %vm1829 = vweird.f32 %v1823
      %vm1830 = vmor %vm1828, %vm1829
      %v1831 = vsel %vm1830, %v1823, %v1827
      %v1832 = vand.u32 2147483647, %v1807
      %vm1833 = vcmp.eq.f32.partialorder %v1832, 8.507059e+37
      %v1834 = vand.u32 %v1807, 2147483648
      %v1835 = vor.u32 1.1754944e-38, %v1834
      %v1836 = vsel %vm1833, %v1835, %v1831
      %v1837 = vmul.f32 1.0, %v1836
      %v1838 = vadd.f32 %v1795, %v305
      %v1839 = vmul.f32 %v1822, %v1838
      %v1840 = vadd.f32 %v594, %v1839
      %v1841 = vtanh.pop %v1840
      %v1842 = vsub.f32 %v1757, %v1841
      %v1843 = vmul.f32 %v1837, %v1842
      %v1844 = vadd.f32 %v1841, %v1843
      %s1845 = sadd.s32 %s822, 11
      %p1846 = scmp.lt.s32.totalorder %s1845, 20
      %s1847 = scalar_select %p1846, 1, 0
      %v1848 = vstv %s1847
      %vm1849 = vcmp.eq.s32.totalorder %v1848, 1
      %v1850 = vsel %vm1849, %v1844, %v1757
      %v1851 = vpack.c.bf16 %v1850, %v1850
      %1852 = vmatpush.bf16.msra.mxu0 %v709
      %1853 = vmatpush.bf16.msra.mxu0 %v706
      %1854 = vmatpush.bf16.msra.mxu0 %v703
      %1855 = vmatpush.bf16.msra.mxu0 %v700
      %1856 = vmatpush.bf16.msra.mxu0 %v697
      %1857 = vmatpush.bf16.msra.mxu0 %v694
      %1858 = vmatpush.bf16.msra.mxu0 %v691
      %1859 = vmatpush.bf16.msra.mxu0 %v688
      %1860 = vmatmul.bf16.gmra.mxu0 %v1851
      %v1861 = vpop.f32.mrf.mxu0
      %v1862 = vadd.f32 0.0, %v1861
      %v1863 = vpop.f32.mrf.mxu0
      %1864 = vdwg.mxu0
      %1865 = vmatpush.bf16.msra.mxu0 %v710
      %1866 = vmatpush.bf16.msra.mxu0 %v707
      %1867 = vmatpush.bf16.msra.mxu0 %v704
      %1868 = vmatpush.bf16.msra.mxu0 %v701
      %1869 = vmatpush.bf16.msra.mxu0 %v698
      %1870 = vmatpush.bf16.msra.mxu0 %v695
      %1871 = vmatpush.bf16.msra.mxu0 %v692
      %1872 = vmatpush.bf16.msra.mxu0 %v689
      %1873 = vmatmul.bf16.gmra.mxu0 %v1851
      %v1874 = vpop.f32.mrf.mxu0
      %v1875 = vadd.f32 0.0, %v1874
      %v1876 = vpop.f32.mrf.mxu0
      %1877 = vdwg.mxu0
      %1878 = vmatpush.bf16.msra.mxu0 %v711
      %1879 = vmatpush.bf16.msra.mxu0 %v708
      %1880 = vmatpush.bf16.msra.mxu0 %v705
      %1881 = vmatpush.bf16.msra.mxu0 %v702
      %1882 = vmatpush.bf16.msra.mxu0 %v699
      %1883 = vmatpush.bf16.msra.mxu0 %v696
      %1884 = vmatpush.bf16.msra.mxu0 %v693
      %1885 = vmatpush.bf16.msra.mxu0 %v690
      %1886 = vmatmul.bf16.gmra.mxu0 %v1851
      %v1887 = vpop.f32.mrf.mxu0
      %v1888 = vadd.f32 0.0, %v1887
      %v1889 = vpop.f32.mrf.mxu0
      %1890 = vdwg.mxu0
      %v1891 = vadd.f32 %v499, %v1862
      %v1892 = vadd.f32 %v548, %v1875
      %v1893 = vxor.u32 %v1891, 2147483648
      %v1894 = vxor.u32 %v1892, 2147483648
      %v1895 = vmul.f32 %v1893, 1.442695
      %v1896 = vpow.pop %v1895
      %v1897 = vmul.f32 %v1894, 1.442695
      %v1898 = vpow.pop %v1897
      %v1899 = vadd.f32 %v1896, 1.0
      %v1900 = vadd.f32 %v1898, 1.0
      %v1901 = vrcp.pop %v1899
      %v1902 = vmul.f32 %v1899, %v1901
      %v1903 = vsub.f32 1.0, %v1902
      %v1904 = vmul.f32 %v1901, %v1903
      %v1905 = vadd.f32 %v1901, %v1904
      %vm1906 = vweird.f32 %v1899
      %vm1907 = vweird.f32 %v1901
      %vm1908 = vmor %vm1906, %vm1907
      %v1909 = vsel %vm1908, %v1901, %v1905
      %v1910 = vand.u32 2147483647, %v1899
      %vm1911 = vcmp.eq.f32.partialorder %v1910, 8.507059e+37
      %v1912 = vand.u32 %v1899, 2147483648
      %v1913 = vor.u32 1.1754944e-38, %v1912
      %v1914 = vsel %vm1911, %v1913, %v1909
      %v1915 = vmul.f32 1.0, %v1914
      %v1916 = vrcp.pop %v1900
      %v1917 = vmul.f32 %v1900, %v1916
      %v1918 = vsub.f32 1.0, %v1917
      %v1919 = vmul.f32 %v1916, %v1918
      %v1920 = vadd.f32 %v1916, %v1919
      %vm1921 = vweird.f32 %v1900
      %vm1922 = vweird.f32 %v1916
      %vm1923 = vmor %vm1921, %vm1922
      %v1924 = vsel %vm1923, %v1916, %v1920
      %v1925 = vand.u32 2147483647, %v1900
      %vm1926 = vcmp.eq.f32.partialorder %v1925, 8.507059e+37
      %v1927 = vand.u32 %v1900, 2147483648
      %v1928 = vor.u32 1.1754944e-38, %v1927
      %v1929 = vsel %vm1926, %v1928, %v1924
      %v1930 = vmul.f32 1.0, %v1929
      %v1931 = vadd.f32 %v1888, %v305
      %v1932 = vmul.f32 %v1915, %v1931
      %v1933 = vadd.f32 %v597, %v1932
      %v1934 = vtanh.pop %v1933
      %v1935 = vsub.f32 %v1850, %v1934
      %v1936 = vmul.f32 %v1930, %v1935
      %v1937 = vadd.f32 %v1934, %v1936
      %s1938 = sadd.s32 %s822, 12
      %p1939 = scmp.lt.s32.totalorder %s1938, 20
      %s1940 = scalar_select %p1939, 1, 0
      %v1941 = vstv %s1940
      %vm1942 = vcmp.eq.s32.totalorder %v1941, 1
      %v1943 = vsel %vm1942, %v1937, %v1850
      %v1944 = vpack.c.bf16 %v1943, %v1943
      %1945 = vmatpush.bf16.msra.mxu0 %v709
      %1946 = vmatpush.bf16.msra.mxu0 %v706
      %1947 = vmatpush.bf16.msra.mxu0 %v703
      %1948 = vmatpush.bf16.msra.mxu0 %v700
      %1949 = vmatpush.bf16.msra.mxu0 %v697
      %1950 = vmatpush.bf16.msra.mxu0 %v694
      %1951 = vmatpush.bf16.msra.mxu0 %v691
      %1952 = vmatpush.bf16.msra.mxu0 %v688
      %1953 = vmatmul.bf16.gmra.mxu0 %v1944
      %v1954 = vpop.f32.mrf.mxu0
      %v1955 = vadd.f32 0.0, %v1954
      %v1956 = vpop.f32.mrf.mxu0
      %1957 = vdwg.mxu0
      %1958 = vmatpush.bf16.msra.mxu0 %v710
      %1959 = vmatpush.bf16.msra.mxu0 %v707
      %1960 = vmatpush.bf16.msra.mxu0 %v704
      %1961 = vmatpush.bf16.msra.mxu0 %v701
      %1962 = vmatpush.bf16.msra.mxu0 %v698
      %1963 = vmatpush.bf16.msra.mxu0 %v695
      %1964 = vmatpush.bf16.msra.mxu0 %v692
      %1965 = vmatpush.bf16.msra.mxu0 %v689
      %1966 = vmatmul.bf16.gmra.mxu0 %v1944
      %v1967 = vpop.f32.mrf.mxu0
      %v1968 = vadd.f32 0.0, %v1967
      %v1969 = vpop.f32.mrf.mxu0
      %1970 = vdwg.mxu0
      %1971 = vmatpush.bf16.msra.mxu0 %v711
      %1972 = vmatpush.bf16.msra.mxu0 %v708
      %1973 = vmatpush.bf16.msra.mxu0 %v705
      %1974 = vmatpush.bf16.msra.mxu0 %v702
      %1975 = vmatpush.bf16.msra.mxu0 %v699
      %1976 = vmatpush.bf16.msra.mxu0 %v696
      %1977 = vmatpush.bf16.msra.mxu0 %v693
      %1978 = vmatpush.bf16.msra.mxu0 %v690
      %1979 = vmatmul.bf16.gmra.mxu0 %v1944
      %v1980 = vpop.f32.mrf.mxu0
      %v1981 = vadd.f32 0.0, %v1980
      %v1982 = vpop.f32.mrf.mxu0
      %1983 = vdwg.mxu0
      %v1984 = vadd.f32 %v501, %v1955
      %v1985 = vadd.f32 %v550, %v1968
      %v1986 = vxor.u32 %v1984, 2147483648
      %v1987 = vxor.u32 %v1985, 2147483648
      %v1988 = vmul.f32 %v1986, 1.442695
      %v1989 = vpow.pop %v1988
      %v1990 = vmul.f32 %v1987, 1.442695
      %v1991 = vpow.pop %v1990
      %v1992 = vadd.f32 %v1989, 1.0
      %v1993 = vadd.f32 %v1991, 1.0
      %v1994 = vrcp.pop %v1992
      %v1995 = vmul.f32 %v1992, %v1994
      %v1996 = vsub.f32 1.0, %v1995
      %v1997 = vmul.f32 %v1994, %v1996
      %v1998 = vadd.f32 %v1994, %v1997
      %vm1999 = vweird.f32 %v1992
      %vm2000 = vweird.f32 %v1994
      %vm2001 = vmor %vm1999, %vm2000
      %v2002 = vsel %vm2001, %v1994, %v1998
      %v2003 = vand.u32 2147483647, %v1992
      %vm2004 = vcmp.eq.f32.partialorder %v2003, 8.507059e+37
      %v2005 = vand.u32 %v1992, 2147483648
      %v2006 = vor.u32 1.1754944e-38, %v2005
      %v2007 = vsel %vm2004, %v2006, %v2002
      %v2008 = vmul.f32 1.0, %v2007
      %v2009 = vrcp.pop %v1993
      %v2010 = vmul.f32 %v1993, %v2009
      %v2011 = vsub.f32 1.0, %v2010
      %v2012 = vmul.f32 %v2009, %v2011
      %v2013 = vadd.f32 %v2009, %v2012
      %vm2014 = vweird.f32 %v1993
      %vm2015 = vweird.f32 %v2009
      %vm2016 = vmor %vm2014, %vm2015
      %v2017 = vsel %vm2016, %v2009, %v2013
      %v2018 = vand.u32 2147483647, %v1993
      %vm2019 = vcmp.eq.f32.partialorder %v2018, 8.507059e+37
      %v2020 = vand.u32 %v1993, 2147483648
      %v2021 = vor.u32 1.1754944e-38, %v2020
      %v2022 = vsel %vm2019, %v2021, %v2017
      %v2023 = vmul.f32 1.0, %v2022
      %v2024 = vadd.f32 %v1981, %v305
      %v2025 = vmul.f32 %v2008, %v2024
      %v2026 = vadd.f32 %v599, %v2025
      %v2027 = vtanh.pop %v2026
      %v2028 = vsub.f32 %v1943, %v2027
      %v2029 = vmul.f32 %v2023, %v2028
      %v2030 = vadd.f32 %v2027, %v2029
      %s2031 = sadd.s32 %s822, 13
      %p2032 = scmp.lt.s32.totalorder %s2031, 20
      %s2033 = scalar_select %p2032, 1, 0
      %v2034 = vstv %s2033
      %vm2035 = vcmp.eq.s32.totalorder %v2034, 1
      %v2036 = vsel %vm2035, %v2030, %v1943
      %v2037 = vpack.c.bf16 %v2036, %v2036
      %2038 = vmatpush.bf16.msra.mxu0 %v709
      %2039 = vmatpush.bf16.msra.mxu0 %v706
      %2040 = vmatpush.bf16.msra.mxu0 %v703
      %2041 = vmatpush.bf16.msra.mxu0 %v700
      %2042 = vmatpush.bf16.msra.mxu0 %v697
      %2043 = vmatpush.bf16.msra.mxu0 %v694
      %2044 = vmatpush.bf16.msra.mxu0 %v691
      %2045 = vmatpush.bf16.msra.mxu0 %v688
      %2046 = vmatmul.bf16.gmra.mxu0 %v2037
      %v2047 = vpop.f32.mrf.mxu0
      %v2048 = vadd.f32 0.0, %v2047
      %v2049 = vpop.f32.mrf.mxu0
      %2050 = vdwg.mxu0
      %2051 = vmatpush.bf16.msra.mxu0 %v710
      %2052 = vmatpush.bf16.msra.mxu0 %v707
      %2053 = vmatpush.bf16.msra.mxu0 %v704
      %2054 = vmatpush.bf16.msra.mxu0 %v701
      %2055 = vmatpush.bf16.msra.mxu0 %v698
      %2056 = vmatpush.bf16.msra.mxu0 %v695
      %2057 = vmatpush.bf16.msra.mxu0 %v692
      %2058 = vmatpush.bf16.msra.mxu0 %v689
      %2059 = vmatmul.bf16.gmra.mxu0 %v2037
      %v2060 = vpop.f32.mrf.mxu0
      %v2061 = vadd.f32 0.0, %v2060
      %v2062 = vpop.f32.mrf.mxu0
      %2063 = vdwg.mxu0
      %2064 = vmatpush.bf16.msra.mxu0 %v711
      %2065 = vmatpush.bf16.msra.mxu0 %v708
      %2066 = vmatpush.bf16.msra.mxu0 %v705
      %2067 = vmatpush.bf16.msra.mxu0 %v702
      %2068 = vmatpush.bf16.msra.mxu0 %v699
      %2069 = vmatpush.bf16.msra.mxu0 %v696
      %2070 = vmatpush.bf16.msra.mxu0 %v693
      %2071 = vmatpush.bf16.msra.mxu0 %v690
      %2072 = vmatmul.bf16.gmra.mxu0 %v2037
      %v2073 = vpop.f32.mrf.mxu0
      %v2074 = vadd.f32 0.0, %v2073
      %v2075 = vpop.f32.mrf.mxu0
      %2076 = vdwg.mxu0
      %v2077 = vadd.f32 %v504, %v2048
      %v2078 = vadd.f32 %v553, %v2061
      %v2079 = vxor.u32 %v2077, 2147483648
      %v2080 = vxor.u32 %v2078, 2147483648
      %v2081 = vmul.f32 %v2079, 1.442695
      %v2082 = vpow.pop %v2081
      %v2083 = vmul.f32 %v2080, 1.442695
      %v2084 = vpow.pop %v2083
      %v2085 = vadd.f32 %v2082, 1.0
      %v2086 = vadd.f32 %v2084, 1.0
      %v2087 = vrcp.pop %v2085
      %v2088 = vmul.f32 %v2085, %v2087
      %v2089 = vsub.f32 1.0, %v2088
      %v2090 = vmul.f32 %v2087, %v2089
      %v2091 = vadd.f32 %v2087, %v2090
      %vm2092 = vweird.f32 %v2085
      %vm2093 = vweird.f32 %v2087
      %vm2094 = vmor %vm2092, %vm2093
      %v2095 = vsel %vm2094, %v2087, %v2091
      %v2096 = vand.u32 2147483647, %v2085
      %vm2097 = vcmp.eq.f32.partialorder %v2096, 8.507059e+37
      %v2098 = vand.u32 %v2085, 2147483648
      %v2099 = vor.u32 1.1754944e-38, %v2098
      %v2100 = vsel %vm2097, %v2099, %v2095
      %v2101 = vmul.f32 1.0, %v2100
      %v2102 = vrcp.pop %v2086
      %v2103 = vmul.f32 %v2086, %v2102
      %v2104 = vsub.f32 1.0, %v2103
      %v2105 = vmul.f32 %v2102, %v2104
      %v2106 = vadd.f32 %v2102, %v2105
      %vm2107 = vweird.f32 %v2086
      %vm2108 = vweird.f32 %v2102
      %vm2109 = vmor %vm2107, %vm2108
      %v2110 = vsel %vm2109, %v2102, %v2106
      %v2111 = vand.u32 2147483647, %v2086
      %vm2112 = vcmp.eq.f32.partialorder %v2111, 8.507059e+37
      %v2113 = vand.u32 %v2086, 2147483648
      %v2114 = vor.u32 1.1754944e-38, %v2113
      %v2115 = vsel %vm2112, %v2114, %v2110
      %v2116 = vmul.f32 1.0, %v2115
      %v2117 = vadd.f32 %v2074, %v305
      %v2118 = vmul.f32 %v2101, %v2117
      %v2119 = vadd.f32 %v602, %v2118
      %v2120 = vtanh.pop %v2119
      %v2121 = vsub.f32 %v2036, %v2120
      %v2122 = vmul.f32 %v2116, %v2121
      %v2123 = vadd.f32 %v2120, %v2122
      %s2124 = sadd.s32 %s822, 14
      %p2125 = scmp.lt.s32.totalorder %s2124, 20
      %s2126 = scalar_select %p2125, 1, 0
      %v2127 = vstv %s2126
      %vm2128 = vcmp.eq.s32.totalorder %v2127, 1
      %v2129 = vsel %vm2128, %v2123, %v2036
      %v2130 = vpack.c.bf16 %v2129, %v2129
      %2131 = vmatpush.bf16.msra.mxu0 %v709
      %2132 = vmatpush.bf16.msra.mxu0 %v706
      %2133 = vmatpush.bf16.msra.mxu0 %v703
      %2134 = vmatpush.bf16.msra.mxu0 %v700
      %2135 = vmatpush.bf16.msra.mxu0 %v697
      %2136 = vmatpush.bf16.msra.mxu0 %v694
      %2137 = vmatpush.bf16.msra.mxu0 %v691
      %2138 = vmatpush.bf16.msra.mxu0 %v688
      %2139 = vmatmul.bf16.gmra.mxu0 %v2130
      %v2140 = vpop.f32.mrf.mxu0
      %v2141 = vadd.f32 0.0, %v2140
      %v2142 = vpop.f32.mrf.mxu0
      %2143 = vdwg.mxu0
      %2144 = vmatpush.bf16.msra.mxu0 %v710
      %2145 = vmatpush.bf16.msra.mxu0 %v707
      %2146 = vmatpush.bf16.msra.mxu0 %v704
      %2147 = vmatpush.bf16.msra.mxu0 %v701
      %2148 = vmatpush.bf16.msra.mxu0 %v698
      %2149 = vmatpush.bf16.msra.mxu0 %v695
      %2150 = vmatpush.bf16.msra.mxu0 %v692
      %2151 = vmatpush.bf16.msra.mxu0 %v689
      %2152 = vmatmul.bf16.gmra.mxu0 %v2130
      %v2153 = vpop.f32.mrf.mxu0
      %v2154 = vadd.f32 0.0, %v2153
      %v2155 = vpop.f32.mrf.mxu0
      %2156 = vdwg.mxu0
      %2157 = vmatpush.bf16.msra.mxu0 %v711
      %2158 = vmatpush.bf16.msra.mxu0 %v708
      %2159 = vmatpush.bf16.msra.mxu0 %v705
      %2160 = vmatpush.bf16.msra.mxu0 %v702
      %2161 = vmatpush.bf16.msra.mxu0 %v699
      %2162 = vmatpush.bf16.msra.mxu0 %v696
      %2163 = vmatpush.bf16.msra.mxu0 %v693
      %2164 = vmatpush.bf16.msra.mxu0 %v690
      %2165 = vmatmul.bf16.gmra.mxu0 %v2130
      %v2166 = vpop.f32.mrf.mxu0
      %v2167 = vadd.f32 0.0, %v2166
      %v2168 = vpop.f32.mrf.mxu0
      %2169 = vdwg.mxu0
      %v2170 = vadd.f32 %v506, %v2141
      %v2171 = vadd.f32 %v555, %v2154
      %v2172 = vxor.u32 %v2170, 2147483648
      %v2173 = vxor.u32 %v2171, 2147483648
      %v2174 = vmul.f32 %v2172, 1.442695
      %v2175 = vpow.pop %v2174
      %v2176 = vmul.f32 %v2173, 1.442695
      %v2177 = vpow.pop %v2176
      %v2178 = vadd.f32 %v2175, 1.0
      %v2179 = vadd.f32 %v2177, 1.0
      %v2180 = vrcp.pop %v2178
      %v2181 = vmul.f32 %v2178, %v2180
      %v2182 = vsub.f32 1.0, %v2181
      %v2183 = vmul.f32 %v2180, %v2182
      %v2184 = vadd.f32 %v2180, %v2183
      %vm2185 = vweird.f32 %v2178
      %vm2186 = vweird.f32 %v2180
      %vm2187 = vmor %vm2185, %vm2186
      %v2188 = vsel %vm2187, %v2180, %v2184
      %v2189 = vand.u32 2147483647, %v2178
      %vm2190 = vcmp.eq.f32.partialorder %v2189, 8.507059e+37
      %v2191 = vand.u32 %v2178, 2147483648
      %v2192 = vor.u32 1.1754944e-38, %v2191
      %v2193 = vsel %vm2190, %v2192, %v2188
      %v2194 = vmul.f32 1.0, %v2193
      %v2195 = vrcp.pop %v2179
      %v2196 = vmul.f32 %v2179, %v2195
      %v2197 = vsub.f32 1.0, %v2196
      %v2198 = vmul.f32 %v2195, %v2197
      %v2199 = vadd.f32 %v2195, %v2198
      %vm2200 = vweird.f32 %v2179
      %vm2201 = vweird.f32 %v2195
      %vm2202 = vmor %vm2200, %vm2201
      %v2203 = vsel %vm2202, %v2195, %v2199
      %v2204 = vand.u32 2147483647, %v2179
      %vm2205 = vcmp.eq.f32.partialorder %v2204, 8.507059e+37
      %v2206 = vand.u32 %v2179, 2147483648
      %v2207 = vor.u32 1.1754944e-38, %v2206
      %v2208 = vsel %vm2205, %v2207, %v2203
      %v2209 = vmul.f32 1.0, %v2208
      %v2210 = vadd.f32 %v2167, %v305
      %v2211 = vmul.f32 %v2194, %v2210
      %v2212 = vadd.f32 %v604, %v2211
      %v2213 = vtanh.pop %v2212
      %v2214 = vsub.f32 %v2129, %v2213
      %v2215 = vmul.f32 %v2209, %v2214
      %v2216 = vadd.f32 %v2213, %v2215
      %s2217 = sadd.s32 %s822, 15
      %p2218 = scmp.lt.s32.totalorder %s2217, 20
      %s2219 = scalar_select %p2218, 1, 0
      %v2220 = vstv %s2219
      %vm2221 = vcmp.eq.s32.totalorder %v2220, 1
      %v2222 = vsel %vm2221, %v2216, %v2129
      %2223 = vst [vmem:[%s247] sm:$0xff] %v2222
      %p2224 = scmp.lt.s32.totalorder %s20, 0
      %s2225 = scalar_select %p2224, %s20, 0
      %s2226 = smul.addr %s2225, 8
      %s2227 = scalar_lea.vmem %s5, %s2226
      // Predicated region
      $region45: #{encoder_forward.1} parent=39 // pred_check
        %p2228 = pneg %p158
      $region46: #{encoder_forward.1} parent=39 // pred_check_branch
        %2230 = sbr.rel (%p2228) target = $region48
      $region47: #{encoder_forward.1} parent=39 // pred_region
        _
      $region48: #{encoder_forward.1} parent=39 // pred_fallthru
        _
      // Predicated region
      $region49: #{encoder_forward.1} parent=39 // pred_check
        %p2231 = pneg %p158
      $region50: #{encoder_forward.1} parent=39 // pred_check_branch
        %2233 = sbr.rel (%p2231) target = $region52
      $region51: #{encoder_forward.1} parent=39 // pred_region
        %p2234 = scmp.lt.s32.totalorder %s20, 0
        %s2235 = scalar_select %p2234, %s20, 0
        %s2236 = smul.addr %s2235, 8
        %s2237 = scalar_lea.vmem %s5, %s2236
      $region52: #{encoder_forward.1} parent=39 // pred_fallthru
        _
    $region40: #{encoder_forward.1} parent=5 // pred_fallthru
      _
    %p2238 = scmp.le.s32.totalorder 2, %s11
    // Predicated region
    $region53: #{encoder_forward.1} parent=5 // pred_check
      %p2239 = pneg %p2238
    $region54: #{encoder_forward.1} parent=5 // pred_check_branch
      %2241 = sbr.rel (%p2239) target = $region56
    $region55: #{encoder_forward.1} parent=5 // pred_region
      %s2242 = ssub.s32 %s11, 2
    $region56: #{encoder_forward.1} parent=5 // pred_fallthru
      _
  $region6: #{encoder_forward.1} parent=0 // loop_footer
    %s15 = sadd.s32 1, %s11
  $region7: #{encoder_forward.1} parent=0 // loop_footer_branch
    %10 = sbr.rel target = $region3
  $region8: #{encoder_forward.1} parent=0 // loop_exit
    _

</llo_original>
